<compile_context>
chip_gen: v7x
topology: tpu7x:2x2x1
jax: 0.10.0
libtpu: 0.0.40
codegen_flags: <defaults>
</compile_context>

<pallas_src>
import functools
import math

import numpy as np

import jax
import jax.numpy as jnp
from jax import lax
from jax.experimental import pallas as pl
from jax.experimental.pallas import tpu as pltpu


def _head_kernel(x_ref, halo_ref, w1_ref, b1_ref, w2_ref, b2_ref, o_ref,
                 slab_ref, *, wp):
    """One (batch, row-chunk) grid step.

    x_ref:    (1, Cin, CH*Wp)       non-overlapping chunk of the padded image (flat)
    halo_ref: (1, 1, Cin, 3*Wp)     the 3 padded rows following the chunk
    w1_ref:   (3, Cin, 3*Cin)       conv3x3 weights, [dy][out, dx*Cin+in]
    b1_ref:   (Cin, 1)              conv3x3 bias (f32)
    w2_ref:   (Cout, Cin)           conv1x1 weights (out, in)
    b2_ref:   (Cout, 1)             conv1x1 bias (f32)
    o_ref:    (1, Cout, CH*Wp)      lane-dense output chunk
    slab_ref: (3*Cin, (CH+2)*Wp)    VMEM scratch: dx-shifted slab
    """
    cin = x_ref.shape[1]
    lout = o_ref.shape[2]            # CH * Wp
    lslab = slab_ref.shape[1]        # (CH + 2) * Wp

    # ---- dx-shifted slab: 3 row-blocks (vs. 9 taps before) -----------------
    # slab[dx*Cin + ci, j] == x_virtual[ci, j + dx], where x_virtual is the
    # chunk followed by its 3 halo rows.
    for dx in range(3):
        r0, r1 = dx * cin, (dx + 1) * cin
        # bulk: from the chunk (dst lane offset 0; dx shift is on the read)
        slab_ref[r0:r1, 0:lout - dx] = x_ref[0, :, dx:lout]
        # tail: last ~2 rows' worth comes from the 3 halo rows
        slab_ref[r0:r1, lout - dx:lslab] = halo_ref[0, 0, :, 0:lslab - lout + dx]

    # ---- conv3x3 = 3 accumulating MXU dots (K = 3*Cin each), f32 acc -------
    y = jnp.dot(w1_ref[0], slab_ref[:, 0:lout],
                preferred_element_type=jnp.float32)
    y = y + jnp.dot(w1_ref[1], slab_ref[:, wp:wp + lout],
                    preferred_element_type=jnp.float32)
    y = y + jnp.dot(w1_ref[2], slab_ref[:, 2 * wp:2 * wp + lout],
                    preferred_element_type=jnp.float32)

    y = jnp.maximum(y + b1_ref[...], 0.0)              # bias + ReLU in f32

    # ---- conv1x1 (+bias) ----------------------------------------------------
    out = jnp.dot(w2_ref[...], y.astype(w2_ref.dtype),
                  preferred_element_type=jnp.float32)
    o_ref[0] = (out + b2_ref[...]).astype(o_ref.dtype)


def _round_up(x, m):
    return -(-x // m) * m


def _vmem_need(ch, wp, cin, cout, cbytes, obytes):
    """Rough per-step VMEM footprint (bytes) for the chunk-rows heuristic."""
    lout = ch * wp
    n = 0
    n += 2 * cin * lout * cbytes                 # input chunk (double-buffered)
    n += 2 * cin * 3 * wp * cbytes               # halo rows   (double-buffered)
    n += 2 * (9 * cin * cin + cout * cin) * cbytes + 2 * (cin + cout) * 4  # weights/bias
    n += 2 * cout * lout * obytes                # output chunk (double-buffered)
    n += 3 * cin * (ch + 2) * wp * cbytes        # dx-shifted slab scratch
    n += cin * lout * 4 + cout * lout * 4        # f32 intermediates (y, out)
    return n


def _pick_chunk_rows(H, N, wp_ub, cin, cout, cbytes, obytes, budget):
    """Largest divisor of H fitting the VMEM budget; >=2 grid steps if N==1."""
    divisors = [d for d in range(H, 0, -1) if H % d == 0]
    for ch in divisors:
        if N == 1 and ch == H and H > 1:
            continue  # keep >= 2 parallel grid steps so both v7x cores get work
        if _vmem_need(ch, wp_ub, cin, cout, cbytes, obytes) <= budget:
            return ch
    return 1


def centernet_head_block(x, w1, b1, w2, b2, *, chunk_rows=None,
                         compute_dtype=None, trim_width=True):
    """CenterNetHeadBlock forward: conv3x3(+bias) -> ReLU -> conv1x1(+bias).

    x : (N, Cin, H, W) NCHW (PyTorch layout).
    w1: (3, 3, Cin, Cin)  conv3x3 weights, layout (kh, kw, in, out)
        (PyTorch OIHW -> this layout via w.permute(2, 3, 1, 0)).
    b1: (Cin,).  w2: (Cin, Cout) conv1x1 weights (in, out).  b2: (Cout,).
    Returns (N, Cout, H, W) (or (N, Cout, H, Wp) if trim_width=False).

    compute_dtype defaults to bfloat16 on all TPU generations (the MXU is
    bf16-native on v5e/v6e/v7x); accumulation, bias and ReLU stay f32.
    """
    N, Cin, H, W = x.shape
    Cout = w2.shape[1]
    out_dtype = x.dtype
    if compute_dtype is None:
        compute_dtype = jnp.bfloat16
    cbytes = np.dtype(compute_dtype).itemsize
    obytes = np.dtype(out_dtype).itemsize

    # --- generation-aware VMEM budget (v5e/v6e: 128 MiB, v7x: 64 MiB) -------
    try:
        vmem_cap = int(pltpu.get_tpu_info().vmem_capacity_bytes)
    except Exception:
        vmem_cap = 64 << 20            # conservative fallback (v7x per-core)
    budget = int(0.4 * vmem_cap)       # target <=~40% of capacity per step

    # --- row-chunk selection (divides H; bounded by the VMEM budget) --------
    wp_ub = _round_up(W + 2, 128)      # upper bound on Wp for the budget check
    if chunk_rows is None:
        CH = _pick_chunk_rows(H, N, wp_ub, Cin, Cout, cbytes, obytes, budget)
    else:
        if H % chunk_rows:
            raise ValueError("chunk_rows must divide H")
        CH = chunk_rows
    nC = H // CH

    # --- padded row width Wp --------------------------------------------------
    w_need = W + 2                     # 1 left pad + >=1 right pad
    wp128 = _round_up(w_need, 128)
    if wp128 <= math.ceil(1.15 * w_need):
        Wp = wp128                     # cheap -> vreg-aligned dy*Wp tap offsets
    else:
        g = 128 // math.gcd(CH, 128)
        Wp = _round_up(w_need, g)      # smallest width with CH*Wp % 128 == 0
    assert Wp >= W + 2
    Lout = CH * Wp
    Lslab = (CH + 2) * Wp

    # --- ONE fused XLA pass: cast + zero-pad + flatten (no halo stack) ------
    xp = jnp.pad(x.astype(compute_dtype),
                 ((0, 0), (0, 0), (1, 2), (1, Wp - W - 1)))   # (N, Cin, H+3, Wp)
    xpf = xp.reshape(N, Cin, (H + 3) * Wp)
    # tiny per-chunk bottom-halo rows (3 rows per chunk, ~3/CH of the image)
    halos = jnp.stack(
        [xp[:, :, (c + 1) * CH:(c + 1) * CH + 3, :].reshape(N, Cin, 3 * Wp)
         for c in range(nC)], axis=1)                          # (N, nC, Cin, 3*Wp)

    # --- resident weights: pre-flattened, one (out, dx*Cin+in) slab per dy --
    w1k = jnp.transpose(w1, (0, 3, 1, 2)).reshape(3, Cin, 3 * Cin).astype(compute_dtype)
    w2t = jnp.transpose(w2, (1, 0)).astype(compute_dtype)      # (Cout, Cin)
    b1c = b1.reshape(Cin, 1).astype(jnp.float32)
    b2c = b2.reshape(Cout, 1).astype(jnp.float32)

    vmem_limit = int(min(0.9 * vmem_cap,
                         max(32 << 20,
                             2 * _vmem_need(CH, Wp, Cin, Cout, cbytes, obytes))))

    kernel = functools.partial(_head_kernel, wp=Wp)

    def build(single_buffer_resident):
        def resident(shape):
            idx = lambda n, c, _nd=len(shape): (0,) * _nd
            if single_buffer_resident:
                # constant index_map -> a second pipeline buffer is dead VMEM
                return pl.BlockSpec(shape, idx, pipeline_mode=pl.Buffered(1))
            return pl.BlockSpec(shape, idx)

        return pl.pallas_call(
            kernel,
            out_shape=jax.ShapeDtypeStruct((N, Cout, H * Wp), out_dtype),
            grid_spec=pltpu.PrefetchScalarGridSpec(
                num_scalar_prefetch=0,
                grid=(N, nC),
                in_specs=[
                    pl.BlockSpec((1, Cin, Lout), lambda n, c: (n, 0, c)),
                    pl.BlockSpec((1, 1, Cin, 3 * Wp), lambda n, c: (n, c, 0, 0)),
                    resident((3, Cin, 3 * Cin)),
                    resident((Cin, 1)),
                    resident((Cout, Cin)),
                    resident((Cout, 1)),
                ],
                out_specs=pl.BlockSpec((1, Cout, Lout), lambda n, c: (n, 0, c)),
                scratch_shapes=[pltpu.VMEM((3 * Cin, Lslab), compute_dtype)],
            ),
            compiler_params=pltpu.CompilerParams(
                dimension_semantics=("parallel", "parallel"),
                vmem_limit_bytes=vmem_limit),
        )

    args = (xpf, halos, w1k, b1c, w2t, b2c)
    try:
        out_flat = build(True)(*args)
    except Exception:
        # pipeline_mode=pl.Buffered(1) not supported by this Pallas build:
        # fall back to default (double-buffered) resident operands.
        out_flat = build(False)(*args)

    out = out_flat.reshape(N, Cout, H, Wp)                     # free reshape (NCHW)
    if trim_width:
        # Columns [W, Wp) are junk (right pad / row wrap); drop them.  Pass
        # trim_width=False to hand the lane-padded layout to a fused consumer.
        out = out[:, :, :, :W]
    return out


def _reference(x_nchw, w1, b1, w2, b2):
    """Pure-JAX reference mirroring the PyTorch forward (NCHW convs)."""
    w1_oihw = jnp.transpose(w1, (3, 2, 0, 1))
    w2_oihw = jnp.transpose(w2.reshape(w2.shape[0], w2.shape[1], 1, 1),
                            (1, 0, 2, 3))
    dn = ("NCHW", "OIHW", "NCHW")
    y = lax.conv_general_dilated(x_nchw, w1_oihw, (1, 1), "SAME",
                                 dimension_numbers=dn)
    y = jnp.maximum(y + b1[None, :, None, None], 0.0)
    y = lax.conv_general_dilated(y, w2_oihw, (1, 1), "VALID",
                                 dimension_numbers=dn)
    return y + b2[None, :, None, None]


if __name__ == "__main__":
    key = jax.random.PRNGKey(0)
    kx, k1, kb1, k2, kb2 = jax.random.split(key, 5)

    N, Cin, H, W = 2, 4, 16, 16
    Cout = 8

    x = jax.random.normal(kx, (N, Cin, H, W), dtype=jnp.float32)
    # conv1: 3x3, Cin -> Cin, bias;  conv2: 1x1, Cin -> Cout, bias.
    w1 = jax.random.normal(k1, (3, 3, Cin, Cin), dtype=jnp.float32) * (
        1.0 / jnp.sqrt(9.0 * Cin))
    b1 = jax.random.normal(kb1, (Cin,), dtype=jnp.float32) * 0.1
    w2 = jax.random.normal(k2, (Cin, Cout), dtype=jnp.float32) * (
        1.0 / jnp.sqrt(1.0 * Cin))
    b2 = jax.random.normal(kb2, (Cout,), dtype=jnp.float32) * 0.1

    ref = jax.block_until_ready(_reference(x, w1, b1, w2, b2))

    # f32 operands, forced 2 row chunks per image (exercises the halo path at
    # an interior chunk boundary and the multi-step grid).
    out = jax.block_until_ready(
        centernet_head_block(x, w1, b1, w2, b2, chunk_rows=8,
                             compute_dtype=jnp.float32))
    assert out.shape == (N, Cout, H, W)
    assert jnp.allclose(out, ref, rtol=1e-4, atol=1e-4), "f32 mismatch vs reference"

    # Default path: bf16 MXU operands (all chips) + auto chunk selection.
    out_bf16 = jax.block_until_ready(centernet_head_block(x, w1, b1, w2, b2))
    assert out_bf16.shape == (N, Cout, H, W)
    assert jnp.allclose(out_bf16, ref, rtol=5e-2, atol=5e-2), "bf16 mismatch vs reference"

    print("KERNEL_OK")
</pallas_src>

<mosaic_0001>
module attributes {stable_mosaic.version = 11 : i64} {
  func.func @_head_kernel(%arg0: i32, %arg1: i32, %arg2: memref<1x4x256xf32, #tpu.memory_space<vmem>>, %arg3: memref<1x1x4x96xf32, #tpu.memory_space<vmem>>, %arg4: memref<3x4x12xf32, #tpu.memory_space<vmem>>, %arg5: memref<4x1xf32, #tpu.memory_space<vmem>>, %arg6: memref<8x4xf32, #tpu.memory_space<vmem>>, %arg7: memref<8x1xf32, #tpu.memory_space<vmem>>, %arg8: memref<1x8x256xf32, #tpu.memory_space<vmem>>, %arg9: memref<12x320xf32, #tpu.memory_space<vmem>>) attributes {dimension_semantics = [#tpu.dimension_semantics<parallel>, #tpu.dimension_semantics<parallel>], iteration_bounds = array<i64: 2, 2>, scalar_prefetch = 0 : i64, scratch_operands = 1 : i64, tpu.core_type = #tpu.core_type<tc>, window_params = [{transform_indices = @transform_0, window_bounds = array<i64: 1, 4, 256>}, {transform_indices = @transform_1, window_bounds = array<i64: 1, 1, 4, 96>}, {pipeline_mode = #tpu.pipeline_mode<synchronous>, transform_indices = @transform_2, window_bounds = array<i64: 3, 4, 12>}, {pipeline_mode = #tpu.pipeline_mode<synchronous>, transform_indices = @transform_3, window_bounds = array<i64: 4, 1>}, {pipeline_mode = #tpu.pipeline_mode<synchronous>, transform_indices = @transform_4, window_bounds = array<i64: 8, 4>}, {pipeline_mode = #tpu.pipeline_mode<synchronous>, transform_indices = @transform_5, window_bounds = array<i64: 8, 1>}, {transform_indices = @transform_6, window_bounds = array<i64: 1, 8, 256>}]} {
    %c0 = arith.constant 0 : index
    %c0_0 = arith.constant 0 : index
    %c0_1 = arith.constant 0 : index
    %0 = vector.load %arg2[%c0, %c0_0, %c0_1] : memref<1x4x256xf32, #tpu.memory_space<vmem>>, vector<1x4x256xf32>
    %1 = vector.shape_cast %0 : vector<1x4x256xf32> to vector<4x256xf32>
    %c0_2 = arith.constant 0 : index
    %c0_3 = arith.constant 0 : index
    %2 = vector.load %arg9[%c0_2, %c0_3] : memref<12x320xf32, #tpu.memory_space<vmem>>, vector<4x256xf32>
    tpu.vector_store %arg9[%c0_2, %c0_3], %1 {strides = array<i32>} : memref<12x320xf32, #tpu.memory_space<vmem>>, vector<4x256xf32>,
    %c0_4 = arith.constant 0 : index
    %c0_5 = arith.constant 0 : index
    %c0_6 = arith.constant 0 : index
    %c0_7 = arith.constant 0 : index
    %3 = vector.load %arg3[%c0_4, %c0_5, %c0_6, %c0_7] : memref<1x1x4x96xf32, #tpu.memory_space<vmem>>, vector<1x1x4x64xf32>
    %4 = vector.shape_cast %3 : vector<1x1x4x64xf32> to vector<4x64xf32>
    %c0_8 = arith.constant 0 : index
    %c256 = arith.constant 256 : index
    %5 = vector.load %arg9[%c0_8, %c256] : memref<12x320xf32, #tpu.memory_space<vmem>>, vector<4x64xf32>
    tpu.vector_store %arg9[%c0_8, %c256], %4 {strides = array<i32>} : memref<12x320xf32, #tpu.memory_space<vmem>>, vector<4x64xf32>,
    %c0_9 = arith.constant 0 : index
    %c0_10 = arith.constant 0 : index
    %c1 = arith.constant 1 : index
    %6 = vector.load %arg2[%c0_9, %c0_10, %c1] : memref<1x4x256xf32, #tpu.memory_space<vmem>>, vector<1x4x255xf32>
    %7 = vector.shape_cast %6 : vector<1x4x255xf32> to vector<4x255xf32>
    %c4 = arith.constant 4 : index
    %c0_11 = arith.constant 0 : index
    %8 = vector.load %arg9[%c4, %c0_11] : memref<12x320xf32, #tpu.memory_space<vmem>>, vector<4x255xf32>
    tpu.vector_store %arg9[%c4, %c0_11], %7 {strides = array<i32>} : memref<12x320xf32, #tpu.memory_space<vmem>>, vector<4x255xf32>,
    %c0_12 = arith.constant 0 : index
    %c0_13 = arith.constant 0 : index
    %c0_14 = arith.constant 0 : index
    %c0_15 = arith.constant 0 : index
    %9 = vector.load %arg3[%c0_12, %c0_13, %c0_14, %c0_15] : memref<1x1x4x96xf32, #tpu.memory_space<vmem>>, vector<1x1x4x65xf32>
    %10 = vector.shape_cast %9 : vector<1x1x4x65xf32> to vector<4x65xf32>
    %c4_16 = arith.constant 4 : index
    %c255 = arith.constant 255 : index
    %11 = vector.load %arg9[%c4_16, %c255] : memref<12x320xf32, #tpu.memory_space<vmem>>, vector<4x65xf32>
    tpu.vector_store %arg9[%c4_16, %c255], %10 {strides = array<i32>} : memref<12x320xf32, #tpu.memory_space<vmem>>, vector<4x65xf32>,
    %c0_17 = arith.constant 0 : index
    %c0_18 = arith.constant 0 : index
    %c2 = arith.constant 2 : index
    %12 = vector.load %arg2[%c0_17, %c0_18, %c2] : memref<1x4x256xf32, #tpu.memory_space<vmem>>, vector<1x4x254xf32>
    %13 = vector.shape_cast %12 : vector<1x4x254xf32> to vector<4x254xf32>
    %c8 = arith.constant 8 : index
    %c0_19 = arith.constant 0 : index
    %14 = vector.load %arg9[%c8, %c0_19] : memref<12x320xf32, #tpu.memory_space<vmem>>, vector<4x254xf32>
    tpu.vector_store %arg9[%c8, %c0_19], %13 {strides = array<i32>} : memref<12x320xf32, #tpu.memory_space<vmem>>, vector<4x254xf32>,
    %c0_20 = arith.constant 0 : index
    %c0_21 = arith.constant 0 : index
    %c0_22 = arith.constant 0 : index
    %c0_23 = arith.constant 0 : index
    %15 = vector.load %arg3[%c0_20, %c0_21, %c0_22, %c0_23] : memref<1x1x4x96xf32, #tpu.memory_space<vmem>>, vector<1x1x4x66xf32>
    %16 = vector.shape_cast %15 : vector<1x1x4x66xf32> to vector<4x66xf32>
    %c8_24 = arith.constant 8 : index
    %c254 = arith.constant 254 : index
    %17 = vector.load %arg9[%c8_24, %c254] : memref<12x320xf32, #tpu.memory_space<vmem>>, vector<4x66xf32>
    tpu.vector_store %arg9[%c8_24, %c254], %16 {strides = array<i32>} : memref<12x320xf32, #tpu.memory_space<vmem>>, vector<4x66xf32>,
    %c0_25 = arith.constant 0 : index
    %c0_26 = arith.constant 0 : index
    %c0_27 = arith.constant 0 : index
    %18 = vector.load %arg4[%c0_25, %c0_26, %c0_27] : memref<3x4x12xf32, #tpu.memory_space<vmem>>, vector<1x4x12xf32>
    %19 = vector.shape_cast %18 : vector<1x4x12xf32> to vector<4x12xf32>
    %c0_28 = arith.constant 0 : index
    %c0_29 = arith.constant 0 : index
    %20 = vector.load %arg9[%c0_28, %c0_29] : memref<12x320xf32, #tpu.memory_space<vmem>>, vector<12x256xf32>
    %cst = arith.constant dense<0.000000e+00> : vector<4x256xf32>
    %21 = tpu.matmul %19, %20, %cst {dimension_numbers = #tpu.dot_dimension_numbers<[1], [0], [0], [1], [0, 0, 1, 1], [], []>} : vector<4x12xf32>, vector<12x256xf32>, vector<4x256xf32> -> vector<4x256xf32>
    %c1_30 = arith.constant 1 : index
    %c0_31 = arith.constant 0 : index
    %c0_32 = arith.constant 0 : index
    %22 = vector.load %arg4[%c1_30, %c0_31, %c0_32] : memref<3x4x12xf32, #tpu.memory_space<vmem>>, vector<1x4x12xf32>
    %23 = vector.shape_cast %22 : vector<1x4x12xf32> to vector<4x12xf32>
    %c0_33 = arith.constant 0 : index
    %c32 = arith.constant 32 : index
    %24 = vector.load %arg9[%c0_33, %c32] : memref<12x320xf32, #tpu.memory_space<vmem>>, vector<12x256xf32>
    %cst_34 = arith.constant dense<0.000000e+00> : vector<4x256xf32>
    %25 = tpu.matmul %23, %24, %cst_34 {dimension_numbers = #tpu.dot_dimension_numbers<[1], [0], [0], [1], [0, 0, 1, 1], [], []>} : vector<4x12xf32>, vector<12x256xf32>, vector<4x256xf32> -> vector<4x256xf32>
    %26 = arith.addf %21, %25 : vector<4x256xf32>
    %c2_35 = arith.constant 2 : index
    %c0_36 = arith.constant 0 : index
    %c0_37 = arith.constant 0 : index
    %27 = vector.load %arg4[%c2_35, %c0_36, %c0_37] : memref<3x4x12xf32, #tpu.memory_space<vmem>>, vector<1x4x12xf32>
    %28 = vector.shape_cast %27 : vector<1x4x12xf32> to vector<4x12xf32>
    %c0_38 = arith.constant 0 : index
    %c64 = arith.constant 64 : index
    %29 = vector.load %arg9[%c0_38, %c64] : memref<12x320xf32, #tpu.memory_space<vmem>>, vector<12x256xf32>
    %cst_39 = arith.constant dense<0.000000e+00> : vector<4x256xf32>
    %30 = tpu.matmul %28, %29, %cst_39 {dimension_numbers = #tpu.dot_dimension_numbers<[1], [0], [0], [1], [0, 0, 1, 1], [], []>} : vector<4x12xf32>, vector<12x256xf32>, vector<4x256xf32> -> vector<4x256xf32>
    %31 = arith.addf %26, %30 : vector<4x256xf32>
    %c0_40 = arith.constant 0 : index
    %c0_41 = arith.constant 0 : index
    %32 = vector.load %arg5[%c0_40, %c0_41] : memref<4x1xf32, #tpu.memory_space<vmem>>, vector<4x1xf32>
    %33 = vector.broadcast %32 : vector<4x1xf32> to vector<4x256xf32>
    %34 = arith.addf %31, %33 : vector<4x256xf32>
    %cst_42 = arith.constant 0.000000e+00 : f32
    %35 = vector.broadcast %cst_42 : f32 to vector<4x256xf32>
    %36 = arith.maximumf %34, %35 : vector<4x256xf32>
    %c0_43 = arith.constant 0 : index
    %c0_44 = arith.constant 0 : index
    %37 = vector.load %arg6[%c0_43, %c0_44] : memref<8x4xf32, #tpu.memory_space<vmem>>, vector<8x4xf32>
    %cst_45 = arith.constant dense<0.000000e+00> : vector<8x256xf32>
    %38 = tpu.matmul %37, %36, %cst_45 {dimension_numbers = #tpu.dot_dimension_numbers<[1], [0], [0], [1], [0, 0, 1, 1], [], []>} : vector<8x4xf32>, vector<4x256xf32>, vector<8x256xf32> -> vector<8x256xf32>
    %c0_46 = arith.constant 0 : index
    %c0_47 = arith.constant 0 : index
    %39 = vector.load %arg7[%c0_46, %c0_47] : memref<8x1xf32, #tpu.memory_space<vmem>>, vector<8x1xf32>
    %40 = vector.broadcast %39 : vector<8x1xf32> to vector<8x256xf32>
    %41 = arith.addf %38, %40 : vector<8x256xf32>
    %c0_48 = arith.constant 0 : index
    %c0_49 = arith.constant 0 : index
    %c0_50 = arith.constant 0 : index
    %42 = vector.load %arg8[%c0_48, %c0_49, %c0_50] : memref<1x8x256xf32, #tpu.memory_space<vmem>>, vector<1x8x256xf32>
    %43 = vector.shape_cast %42 : vector<1x8x256xf32> to vector<8x256xf32>
    %44 = vector.shape_cast %41 : vector<8x256xf32> to vector<1x8x256xf32>
    tpu.vector_store %arg8[%c0_48, %c0_49, %c0_50], %44 {strides = array<i32>} : memref<1x8x256xf32, #tpu.memory_space<vmem>>, vector<1x8x256xf32>,
    return
  }
  func.func @transform_0(%arg0: i32, %arg1: i32) -> (i32, i32, i32) {
    %c0_i32 = arith.constant 0 : i32
    %c0_i32_0 = arith.constant 0 : i32
    return %arg0, %c0_i32, %arg1 : i32, i32, i32
  }
  func.func @transform_1(%arg0: i32, %arg1: i32) -> (i32, i32, i32, i32) {
    %c0_i32 = arith.constant 0 : i32
    %c0_i32_0 = arith.constant 0 : i32
    %c0_i32_1 = arith.constant 0 : i32
    return %arg0, %arg1, %c0_i32, %c0_i32_0 : i32, i32, i32, i32
  }
  func.func @transform_2(%arg0: i32, %arg1: i32) -> (i32, i32, i32) {
    %c0_i32 = arith.constant 0 : i32
    %c0_i32_0 = arith.constant 0 : i32
    %c0_i32_1 = arith.constant 0 : i32
    %c0_i32_2 = arith.constant 0 : i32
    return %c0_i32, %c0_i32_0, %c0_i32_1 : i32, i32, i32
  }
  func.func @transform_3(%arg0: i32, %arg1: i32) -> (i32, i32) {
    %c0_i32 = arith.constant 0 : i32
    %c0_i32_0 = arith.constant 0 : i32
    %c0_i32_1 = arith.constant 0 : i32
    return %c0_i32, %c0_i32_0 : i32, i32
  }
  func.func @transform_4(%arg0: i32, %arg1: i32) -> (i32, i32) {
    %c0_i32 = arith.constant 0 : i32
    %c0_i32_0 = arith.constant 0 : i32
    %c0_i32_1 = arith.constant 0 : i32
    return %c0_i32, %c0_i32_0 : i32, i32
  }
  func.func @transform_5(%arg0: i32, %arg1: i32) -> (i32, i32) {
    %c0_i32 = arith.constant 0 : i32
    %c0_i32_0 = arith.constant 0 : i32
    %c0_i32_1 = arith.constant 0 : i32
    return %c0_i32, %c0_i32_0 : i32, i32
  }
  func.func @transform_6(%arg0: i32, %arg1: i32) -> (i32, i32, i32) {
    %c0_i32 = arith.constant 0 : i32
    %c0_i32_0 = arith.constant 0 : i32
    return %arg0, %c0_i32, %arg1 : i32, i32, i32
  }
}

module attributes {stable_mosaic.version = 11 : i64} {
  func.func @_head_kernel(%arg0: i32, %arg1: i32, %arg2: memref<1x4x256xf32, #tpu.memory_space<vmem>>, %arg3: memref<1x1x4x96xf32, #tpu.memory_space<vmem>>, %arg4: memref<3x4x12xf32, #tpu.memory_space<vmem>>, %arg5: memref<4x1xf32, #tpu.memory_space<vmem>>, %arg6: memref<8x4xf32, #tpu.memory_space<vmem>>, %arg7: memref<8x1xf32, #tpu.memory_space<vmem>>, %arg8: memref<1x8x256xf32, #tpu.memory_space<vmem>>, %arg9: memref<12x320xf32, #tpu.memory_space<vmem>>) attributes {dimension_semantics = [#tpu.dimension_semantics<parallel>, #tpu.dimension_semantics<parallel>], iteration_bounds = array<i64: 2, 2>, scalar_prefetch = 0 : i64, scratch_operands = 1 : i64, tpu.core_type = #tpu.core_type<tc>, window_params = [{transform_indices = @transform_0, window_bounds = array<i64: 1, 4, 256>}, {transform_indices = @transform_1, window_bounds = array<i64: 1, 1, 4, 96>}, {pipeline_mode = #tpu.pipeline_mode<synchronous>, transform_indices = @transform_2, window_bounds = array<i64: 3, 4, 12>}, {pipeline_mode = #tpu.pipeline_mode<synchronous>, transform_indices = @transform_3, window_bounds = array<i64: 4, 1>}, {pipeline_mode = #tpu.pipeline_mode<synchronous>, transform_indices = @transform_4, window_bounds = array<i64: 8, 4>}, {pipeline_mode = #tpu.pipeline_mode<synchronous>, transform_indices = @transform_5, window_bounds = array<i64: 8, 1>}, {transform_indices = @transform_6, window_bounds = array<i64: 1, 8, 256>}]} {
    %c0 = arith.constant 0 : index
    %c0_0 = arith.constant 0 : index
    %c0_1 = arith.constant 0 : index
    %0 = vector.load %arg2[%c0, %c0_0, %c0_1] : memref<1x4x256xf32, #tpu.memory_space<vmem>>, vector<1x4x256xf32>
    %1 = vector.shape_cast %0 : vector<1x4x256xf32> to vector<4x256xf32>
    %c0_2 = arith.constant 0 : index
    %c0_3 = arith.constant 0 : index
    %2 = vector.load %arg9[%c0_2, %c0_3] : memref<12x320xf32, #tpu.memory_space<vmem>>, vector<4x256xf32>
    tpu.vector_store %arg9[%c0_2, %c0_3], %1 {strides = array<i32>} : memref<12x320xf32, #tpu.memory_space<vmem>>, vector<4x256xf32>,
    %c0_4 = arith.constant 0 : index
    %c0_5 = arith.constant 0 : index
    %c0_6 = arith.constant 0 : index
    %c0_7 = arith.constant 0 : index
    %3 = vector.load %arg3[%c0_4, %c0_5, %c0_6, %c0_7] : memref<1x1x4x96xf32, #tpu.memory_space<vmem>>, vector<1x1x4x64xf32>
    %4 = vector.shape_cast %3 : vector<1x1x4x64xf32> to vector<4x64xf32>
    %c0_8 = arith.constant 0 : index
    %c256 = arith.constant 256 : index
    %5 = vector.load %arg9[%c0_8, %c256] : memref<12x320xf32, #tpu.memory_space<vmem>>, vector<4x64xf32>
    tpu.vector_store %arg9[%c0_8, %c256], %4 {strides = array<i32>} : memref<12x320xf32, #tpu.memory_space<vmem>>, vector<4x64xf32>,
    %c0_9 = arith.constant 0 : index
    %c0_10 = arith.constant 0 : index
    %c1 = arith.constant 1 : index
    %6 = vector.load %arg2[%c0_9, %c0_10, %c1] : memref<1x4x256xf32, #tpu.memory_space<vmem>>, vector<1x4x255xf32>
    %7 = vector.shape_cast %6 : vector<1x4x255xf32> to vector<4x255xf32>
    %c4 = arith.constant 4 : index
    %c0_11 = arith.constant 0 : index
    %8 = vector.load %arg9[%c4, %c0_11] : memref<12x320xf32, #tpu.memory_space<vmem>>, vector<4x255xf32>
    tpu.vector_store %arg9[%c4, %c0_11], %7 {strides = array<i32>} : memref<12x320xf32, #tpu.memory_space<vmem>>, vector<4x255xf32>,
    %c0_12 = arith.constant 0 : index
    %c0_13 = arith.constant 0 : index
    %c0_14 = arith.constant 0 : index
    %c0_15 = arith.constant 0 : index
    %9 = vector.load %arg3[%c0_12, %c0_13, %c0_14, %c0_15] : memref<1x1x4x96xf32, #tpu.memory_space<vmem>>, vector<1x1x4x65xf32>
    %10 = vector.shape_cast %9 : vector<1x1x4x65xf32> to vector<4x65xf32>
    %c4_16 = arith.constant 4 : index
    %c255 = arith.constant 255 : index
    %11 = vector.load %arg9[%c4_16, %c255] : memref<12x320xf32, #tpu.memory_space<vmem>>, vector<4x65xf32>
    tpu.vector_store %arg9[%c4_16, %c255], %10 {strides = array<i32>} : memref<12x320xf32, #tpu.memory_space<vmem>>, vector<4x65xf32>,
    %c0_17 = arith.constant 0 : index
    %c0_18 = arith.constant 0 : index
    %c2 = arith.constant 2 : index
    %12 = vector.load %arg2[%c0_17, %c0_18, %c2] : memref<1x4x256xf32, #tpu.memory_space<vmem>>, vector<1x4x254xf32>
    %13 = vector.shape_cast %12 : vector<1x4x254xf32> to vector<4x254xf32>
    %c8 = arith.constant 8 : index
    %c0_19 = arith.constant 0 : index
    %14 = vector.load %arg9[%c8, %c0_19] : memref<12x320xf32, #tpu.memory_space<vmem>>, vector<4x254xf32>
    tpu.vector_store %arg9[%c8, %c0_19], %13 {strides = array<i32>} : memref<12x320xf32, #tpu.memory_space<vmem>>, vector<4x254xf32>,
    %c0_20 = arith.constant 0 : index
    %c0_21 = arith.constant 0 : index
    %c0_22 = arith.constant 0 : index
    %c0_23 = arith.constant 0 : index
    %15 = vector.load %arg3[%c0_20, %c0_21, %c0_22, %c0_23] : memref<1x1x4x96xf32, #tpu.memory_space<vmem>>, vector<1x1x4x66xf32>
    %16 = vector.shape_cast %15 : vector<1x1x4x66xf32> to vector<4x66xf32>
    %c8_24 = arith.constant 8 : index
    %c254 = arith.constant 254 : index
    %17 = vector.load %arg9[%c8_24, %c254] : memref<12x320xf32, #tpu.memory_space<vmem>>, vector<4x66xf32>
    tpu.vector_store %arg9[%c8_24, %c254], %16 {strides = array<i32>} : memref<12x320xf32, #tpu.memory_space<vmem>>, vector<4x66xf32>,
    %c0_25 = arith.constant 0 : index
    %c0_26 = arith.constant 0 : index
    %c0_27 = arith.constant 0 : index
    %18 = vector.load %arg4[%c0_25, %c0_26, %c0_27] : memref<3x4x12xf32, #tpu.memory_space<vmem>>, vector<1x4x12xf32>
    %19 = vector.shape_cast %18 : vector<1x4x12xf32> to vector<4x12xf32>
    %c0_28 = arith.constant 0 : index
    %c0_29 = arith.constant 0 : index
    %20 = vector.load %arg9[%c0_28, %c0_29] : memref<12x320xf32, #tpu.memory_space<vmem>>, vector<12x256xf32>
    %cst = arith.constant dense<0.000000e+00> : vector<4x256xf32>
    %21 = tpu.matmul %19, %20, %cst {dimension_numbers = #tpu.dot_dimension_numbers<[1], [0], [0], [1], [0, 0, 1, 1], [], []>} : vector<4x12xf32>, vector<12x256xf32>, vector<4x256xf32> -> vector<4x256xf32>
    %c1_30 = arith.constant 1 : index
    %c0_31 = arith.constant 0 : index
    %c0_32 = arith.constant 0 : index
    %22 = vector.load %arg4[%c1_30, %c0_31, %c0_32] : memref<3x4x12xf32, #tpu.memory_space<vmem>>, vector<1x4x12xf32>
    %23 = vector.shape_cast %22 : vector<1x4x12xf32> to vector<4x12xf32>
    %c0_33 = arith.constant 0 : index
    %c32 = arith.constant 32 : index
    %24 = vector.load %arg9[%c0_33, %c32] : memref<12x320xf32, #tpu.memory_space<vmem>>, vector<12x256xf32>
    %cst_34 = arith.constant dense<0.000000e+00> : vector<4x256xf32>
    %25 = tpu.matmul %23, %24, %cst_34 {dimension_numbers = #tpu.dot_dimension_numbers<[1], [0], [0], [1], [0, 0, 1, 1], [], []>} : vector<4x12xf32>, vector<12x256xf32>, vector<4x256xf32> -> vector<4x256xf32>
    %26 = arith.addf %21, %25 : vector<4x256xf32>
    %c2_35 = arith.constant 2 : index
    %c0_36 = arith.constant 0 : index
    %c0_37 = arith.constant 0 : index
    %27 = vector.load %arg4[%c2_35, %c0_36, %c0_37] : memref<3x4x12xf32, #tpu.memory_space<vmem>>, vector<1x4x12xf32>
    %28 = vector.shape_cast %27 : vector<1x4x12xf32> to vector<4x12xf32>
    %c0_38 = arith.constant 0 : index
    %c64 = arith.constant 64 : index
    %29 = vector.load %arg9[%c0_38, %c64] : memref<12x320xf32, #tpu.memory_space<vmem>>, vector<12x256xf32>
    %cst_39 = arith.constant dense<0.000000e+00> : vector<4x256xf32>
    %30 = tpu.matmul %28, %29, %cst_39 {dimension_numbers = #tpu.dot_dimension_numbers<[1], [0], [0], [1], [0, 0, 1, 1], [], []>} : vector<4x12xf32>, vector<12x256xf32>, vector<4x256xf32> -> vector<4x256xf32>
    %31 = arith.addf %26, %30 : vector<4x256xf32>
    %c0_40 = arith.constant 0 : index
    %c0_41 = arith.constant 0 : index
    %32 = vector.load %arg5[%c0_40, %c0_41] : memref<4x1xf32, #tpu.memory_space<vmem>>, vector<4x1xf32>
    %33 = vector.broadcast %32 : vector<4x1xf32> to vector<4x256xf32>
    %34 = arith.addf %31, %33 : vector<4x256xf32>
    %cst_42 = arith.constant 0.000000e+00 : f32
    %35 = vector.broadcast %cst_42 : f32 to vector<4x256xf32>
    %36 = arith.maximumf %34, %35 : vector<4x256xf32>
    %c0_43 = arith.constant 0 : index
    %c0_44 = arith.constant 0 : index
    %37 = vector.load %arg6[%c0_43, %c0_44] : memref<8x4xf32, #tpu.memory_space<vmem>>, vector<8x4xf32>
    %cst_45 = arith.constant dense<0.000000e+00> : vector<8x256xf32>
    %38 = tpu.matmul %37, %36, %cst_45 {dimension_numbers = #tpu.dot_dimension_numbers<[1], [0], [0], [1], [0, 0, 1, 1], [], []>} : vector<8x4xf32>, vector<4x256xf32>, vector<8x256xf32> -> vector<8x256xf32>
    %c0_46 = arith.constant 0 : index
    %c0_47 = arith.constant 0 : index
    %39 = vector.load %arg7[%c0_46, %c0_47] : memref<8x1xf32, #tpu.memory_space<vmem>>, vector<8x1xf32>
    %40 = vector.broadcast %39 : vector<8x1xf32> to vector<8x256xf32>
    %41 = arith.addf %38, %40 : vector<8x256xf32>
    %c0_48 = arith.constant 0 : index
    %c0_49 = arith.constant 0 : index
    %c0_50 = arith.constant 0 : index
    %42 = vector.load %arg8[%c0_48, %c0_49, %c0_50] : memref<1x8x256xf32, #tpu.memory_space<vmem>>, vector<1x8x256xf32>
    %43 = vector.shape_cast %42 : vector<1x8x256xf32> to vector<8x256xf32>
    %44 = vector.shape_cast %41 : vector<8x256xf32> to vector<1x8x256xf32>
    tpu.vector_store %arg8[%c0_48, %c0_49, %c0_50], %44 {strides = array<i32>} : memref<1x8x256xf32, #tpu.memory_space<vmem>>, vector<1x8x256xf32>,
    return
  }
  func.func @transform_0(%arg0: i32, %arg1: i32) -> (i32, i32, i32) {
    %c0_i32 = arith.constant 0 : i32
    %c0_i32_0 = arith.constant 0 : i32
    return %arg0, %c0_i32, %arg1 : i32, i32, i32
  }
  func.func @transform_1(%arg0: i32, %arg1: i32) -> (i32, i32, i32, i32) {
    %c0_i32 = arith.constant 0 : i32
    %c0_i32_0 = arith.constant 0 : i32
    %c0_i32_1 = arith.constant 0 : i32
    return %arg0, %arg1, %c0_i32, %c0_i32_0 : i32, i32, i32, i32
  }
  func.func @transform_2(%arg0: i32, %arg1: i32) -> (i32, i32, i32) {
    %c0_i32 = arith.constant 0 : i32
    %c0_i32_0 = arith.constant 0 : i32
    %c0_i32_1 = arith.constant 0 : i32
    %c0_i32_2 = arith.constant 0 : i32
    return %c0_i32, %c0_i32_0, %c0_i32_1 : i32, i32, i32
  }
  func.func @transform_3(%arg0: i32, %arg1: i32) -> (i32, i32) {
    %c0_i32 = arith.constant 0 : i32
    %c0_i32_0 = arith.constant 0 : i32
    %c0_i32_1 = arith.constant 0 : i32
    return %c0_i32, %c0_i32_0 : i32, i32
  }
  func.func @transform_4(%arg0: i32, %arg1: i32) -> (i32, i32) {
    %c0_i32 = arith.constant 0 : i32
    %c0_i32_0 = arith.constant 0 : i32
    %c0_i32_1 = arith.constant 0 : i32
    return %c0_i32, %c0_i32_0 : i32, i32
  }
  func.func @transform_5(%arg0: i32, %arg1: i32) -> (i32, i32) {
    %c0_i32 = arith.constant 0 : i32
    %c0_i32_0 = arith.constant 0 : i32
    %c0_i32_1 = arith.constant 0 : i32
    return %c0_i32, %c0_i32_0 : i32, i32
  }
  func.func @transform_6(%arg0: i32, %arg1: i32) -> (i32, i32, i32) {
    %c0_i32 = arith.constant 0 : i32
    %c0_i32_0 = arith.constant 0 : i32
    return %arg0, %c0_i32, %arg1 : i32, i32, i32
  }
}

</mosaic_0001>

<llo_original>
// kernel: tpu_custom_call.1
$region0: #{tpu_custom_call.1}
  #allocation0 [shape = 'u32[]', space=smem, size = 0x4, offset = 0x4, fixed_abs, tag = 'smem constant byte address 0x4 - core index']
  #allocation1 [shape = 'u32[144,128]{1,0:T(1,128)}', space=vmem, size = 0x12000, scoped, tag = 'internal scratch']
  #allocation2 [shape = 'f32[12,320]{1,0:T(8,128)}', space=vmem, size = 0x6000, scoped, tag = 'scratch operand']
  %s0 = inlined_call_operand.hbm [shape: f32[2,4,608], index: 0, kind: input, shape index: {}]
  %s1 = inlined_call_operand.vmem [shape: f32[2,2,4,96], index: 1, kind: input, shape index: {}]
  %s2 = inlined_call_operand.vmem [shape: f32[3,4,12], index: 2, kind: input, shape index: {}]
  %s3 = inlined_call_operand.vmem [shape: f32[4,1], index: 3, kind: input, shape index: {}]
  %s4 = inlined_call_operand.vmem [shape: f32[8,4], index: 4, kind: input, shape index: {}]
  %s5 = inlined_call_operand.vmem [shape: f32[8,1], index: 5, kind: input, shape index: {}]
  %s6 = inlined_call_operand.hbm [shape: f32[2,8,512], index: 6, kind: output, shape index: {}]
  %s7 = sld [smem:[#allocation0]]
  $region61: #{tpu_custom_call.1} parent=0
    _
  %s9 = ssub.s32 1, %s7
  %s10 = scalar_select 0, %s9, %s7
  $region1: #{tpu_custom_call.1} parent=0
    #allocation3 [shape = 'u8[8192]{0}', space=vmem, size = 0x2000, scoped, tag = 'input window, operand 0']
    #allocation4 [shape = 's32[2]{0}', space=sflag, size = 0x8, scoped, tag = 'scoped memory for tpu_custom_call.1']
    #allocation5 [shape = 's32[2]{0}', space=sflag, size = 0x8, scoped, tag = 'scoped memory for tpu_custom_call.1']
    #allocation6 [shape = 'u8[16384]{0}', space=vmem, size = 0x4000, scoped, tag = 'output window, operand 0']
    %11 = vsyncpa [#allocation4], 0
    %s12 = scalar_lea.sflag [#allocation4], 1
    %13 = vsyncpa %s12, 0
    %14 = vsyncpa [#allocation5], 0
    %s15 = scalar_lea.sflag [#allocation5], 1
    %16 = vsyncpa %s15, 0
    loop: start=0, step=1, limit=6
    $region2: #{tpu_custom_call.1} parent=1 // loop_pre_header
      _
    $region3: #{tpu_custom_call.1} parent=1 // loop_header
      %s18 = sphi 0, %s22
      %p19 = scmp.ge.s32.totalorder %s18, 6
      %s25 = sphi 0, %s37
      %s26 = sphi 0, %s33
      %s27 = sphi 0, %s25
      %s28 = sphi 0, %s26
      %s29 = sphi 0, %s27
      %s30 = sphi 0, %s28
      %s42 = sphi 0, %s44
      %s45 = sphi 0, %s42
      %s46 = sphi 0, %s45
      %s62 = sphi 0, %s46
      %s70 = sphi 0, %s72
      %s73 = sphi 0, %s70
      %s74 = sphi 0, %s73
      %s90 = sphi 0, %s74
      %s94 = sphi 0, %s94
      %s96 = sphi 0, %s94
      %s97 = sphi 0, %s96
      %s111 = sphi 0, %s97
      %s115 = sphi 0, %s115
      %s117 = sphi 0, %s115
      %s118 = sphi 0, %s117
      %s132 = sphi 0, %s118
      %s136 = sphi 0, %s136
      %s138 = sphi 0, %s136
      %s139 = sphi 0, %s138
      %s153 = sphi 0, %s139
      %s157 = sphi 0, %s157
      %s159 = sphi 0, %s157
      %s160 = sphi 0, %s159
      %s174 = sphi 0, %s160
      %s182 = sphi 0, %s184
      %s185 = sphi 0, %s182
      %s186 = sphi 0, %s185
      %s202 = sphi 0, %s186
    $region4: #{tpu_custom_call.1} parent=1 // loop_header_branch
      %21 = sbr.rel (%p19) target = $region8
    $region5: #{tpu_custom_call.1} parent=1 // loop_body
      %s23 = ssub.s32 %s18, 1
      %s24 = ssub.s32 %s18, 2
      %s31 = sadd.s32 1, %s26
      %p32 = scmp.ge.s32.totalorder %s31, 2
      %s33 = scalar_select %p32, 0, %s31
      %s34 = sadd.s32 1, %s25
      %s35 = scalar_select %p32, %s34, %s25
      %p36 = scmp.ge.s32.totalorder %s35, 2
      %s37 = scalar_select %p36, 0, %s35
      %s38 = ssub.s32 %s25, %s37
      %s39 = ssub.s32 %s26, %s33
      %s40 = sor.u32 %s38, %s39
      %p41 = scmp.eq.s32.totalorder %s40, 0
      %s43 = sadd.s32 %s42, 1
      %s44 = scalar_select %p41, %s42, %s43
      %p47 = pneg %p41
      %p48 = scmp.eq.s32.totalorder %s18, 3
      %p49 = por %p47, %p48
      %p50 = scmp.ne.s32.totalorder %s42, %s45
      %p51 = scmp.eq.s32.totalorder %s18, 0
      %p52 = por %p50, %p51
      %p53 = scmp.ne.s32.totalorder %s42, %s45
      %p54 = scmp.eq.s32.totalorder %s23, 3
      %p55 = por %p53, %p54
      %p56 = scmp.ne.s32.totalorder %s45, %s46
      %p57 = scmp.eq.s32.totalorder %s23, 0
      %p58 = por %p56, %p57
      %p59 = scmp.ne.s32.totalorder %s45, %s46
      %p60 = scmp.eq.s32.totalorder %s24, 3
      %p61 = por %p59, %p60
      %p63 = scmp.ne.s32.totalorder %s46, %s62
      %p64 = scmp.eq.s32.totalorder %s24, 0
      %p65 = por %p63, %p64
      %s66 = ssub.s32 %s25, %s37
      %s67 = ssub.s32 %s26, %s33
      %s68 = sor.u32 %s66, %s67
      %p69 = scmp.eq.s32.totalorder %s68, 0
      %s71 = sadd.s32 %s70, 1
      %s72 = scalar_select %p69, %s70, %s71
      %p75 = pneg %p69
      %p76 = scmp.eq.s32.totalorder %s18, 3
      %p77 = por %p75, %p76
      %p78 = scmp.ne.s32.totalorder %s70, %s73
      %p79 = scmp.eq.s32.totalorder %s18, 0
      %p80 = por %p78, %p79
      %p81 = scmp.ne.s32.totalorder %s70, %s73
      %p82 = scmp.eq.s32.totalorder %s23, 3
      %p83 = por %p81, %p82
      %p84 = scmp.ne.s32.totalorder %s73, %s74
      %p85 = scmp.eq.s32.totalorder %s23, 0
      %p86 = por %p84, %p85
      %p87 = scmp.ne.s32.totalorder %s73, %s74
      %p88 = scmp.eq.s32.totalorder %s24, 3
      %p89 = por %p87, %p88
      %p91 = scmp.ne.s32.totalorder %s74, %s90
      %p92 = scmp.eq.s32.totalorder %s24, 0
      %p93 = por %p91, %p92
      %s95 = sadd.s32 %s94, 1
      %p98 = scmp.eq.s32.totalorder %s18, 3
      %p99 = scmp.ne.s32.totalorder %s94, %s96
      %p100 = scmp.eq.s32.totalorder %s18, 0
      %p101 = por %p99, %p100
      %p102 = scmp.ne.s32.totalorder %s94, %s96
      %p103 = scmp.eq.s32.totalorder %s23, 3
      %p104 = por %p102, %p103
      %p105 = scmp.ne.s32.totalorder %s96, %s97
      %p106 = scmp.eq.s32.totalorder %s23, 0
      %p107 = por %p105, %p106
      %p108 = scmp.ne.s32.totalorder %s96, %s97
      %p109 = scmp.eq.s32.totalorder %s24, 3
      %p110 = por %p108, %p109
      %p112 = scmp.ne.s32.totalorder %s97, %s111
      %p113 = scmp.eq.s32.totalorder %s24, 0
      %p114 = por %p112, %p113
      %s116 = sadd.s32 %s115, 1
      %p119 = scmp.eq.s32.totalorder %s18, 3
      %p120 = scmp.ne.s32.totalorder %s115, %s117
      %p121 = scmp.eq.s32.totalorder %s18, 0
      %p122 = por %p120, %p121
      %p123 = scmp.ne.s32.totalorder %s115, %s117
      %p124 = scmp.eq.s32.totalorder %s23, 3
      %p125 = por %p123, %p124
      %p126 = scmp.ne.s32.totalorder %s117, %s118
      %p127 = scmp.eq.s32.totalorder %s23, 0
      %p128 = por %p126, %p127
      %p129 = scmp.ne.s32.totalorder %s117, %s118
      %p130 = scmp.eq.s32.totalorder %s24, 3
      %p131 = por %p129, %p130
      %p133 = scmp.ne.s32.totalorder %s118, %s132
      %p134 = scmp.eq.s32.totalorder %s24, 0
      %p135 = por %p133, %p134
      %s137 = sadd.s32 %s136, 1
      %p140 = scmp.eq.s32.totalorder %s18, 3
      %p141 = scmp.ne.s32.totalorder %s136, %s138
      %p142 = scmp.eq.s32.totalorder %s18, 0
      %p143 = por %p141, %p142
      %p144 = scmp.ne.s32.totalorder %s136, %s138
      %p145 = scmp.eq.s32.totalorder %s23, 3
      %p146 = por %p144, %p145
      %p147 = scmp.ne.s32.totalorder %s138, %s139
      %p148 = scmp.eq.s32.totalorder %s23, 0
      %p149 = por %p147, %p148
      %p150 = scmp.ne.s32.totalorder %s138, %s139
      %p151 = scmp.eq.s32.totalorder %s24, 3
      %p152 = por %p150, %p151
      %p154 = scmp.ne.s32.totalorder %s139, %s153
      %p155 = scmp.eq.s32.totalorder %s24, 0
      %p156 = por %p154, %p155
      %s158 = sadd.s32 %s157, 1
      %p161 = scmp.eq.s32.totalorder %s18, 3
      %p162 = scmp.ne.s32.totalorder %s157, %s159
      %p163 = scmp.eq.s32.totalorder %s18, 0
      %p164 = por %p162, %p163
      %p165 = scmp.ne.s32.totalorder %s157, %s159
      %p166 = scmp.eq.s32.totalorder %s23, 3
      %p167 = por %p165, %p166
      %p168 = scmp.ne.s32.totalorder %s159, %s160
      %p169 = scmp.eq.s32.totalorder %s23, 0
      %p170 = por %p168, %p169
      %p171 = scmp.ne.s32.totalorder %s159, %s160
      %p172 = scmp.eq.s32.totalorder %s24, 3
      %p173 = por %p171, %p172
      %p175 = scmp.ne.s32.totalorder %s160, %s174
      %p176 = scmp.eq.s32.totalorder %s24, 0
      %p177 = por %p175, %p176
      %s178 = ssub.s32 %s25, %s37
      %s179 = ssub.s32 %s26, %s33
      %s180 = sor.u32 %s178, %s179
      %p181 = scmp.eq.s32.totalorder %s180, 0
      %s183 = sadd.s32 %s182, 1
      %s184 = scalar_select %p181, %s182, %s183
      %p187 = pneg %p181
      %p188 = scmp.eq.s32.totalorder %s18, 3
      %p189 = por %p187, %p188
      %p190 = scmp.ne.s32.totalorder %s182, %s185
      %p191 = scmp.eq.s32.totalorder %s18, 0
      %p192 = por %p190, %p191
      %p193 = scmp.ne.s32.totalorder %s182, %s185
      %p194 = scmp.eq.s32.totalorder %s23, 3
      %p195 = por %p193, %p194
      %p196 = scmp.ne.s32.totalorder %s185, %s186
      %p197 = scmp.eq.s32.totalorder %s23, 0
      %p198 = por %p196, %p197
      %p199 = scmp.ne.s32.totalorder %s185, %s186
      %p200 = scmp.eq.s32.totalorder %s24, 3
      %p201 = por %p199, %p200
      %p203 = scmp.ne.s32.totalorder %s186, %s202
      %p204 = scmp.eq.s32.totalorder %s24, 0
      %p205 = por %p203, %p204
      %p206 = scmp.le.s32.totalorder 1, %s18
      %p207 = scmp.lt.s32.totalorder %s18, 5
      %p208 = pnand %p206, %p207
      %p209 = pneg %p208
      // Predicated region
      $region9: #{tpu_custom_call.1} parent=5 // pred_check
        _
      $region10: #{tpu_custom_call.1} parent=5 // pred_check_branch
        %211 = sbr.rel (%p208) target = $region12
      $region11: #{tpu_custom_call.1} parent=5 // pred_region
        %s212 = ssub.s32 %s18, 1
        // Predicated region
        $region13: #{tpu_custom_call.1} parent=11 // pred_check
          %p213 = pneg %p107
        $region14: #{tpu_custom_call.1} parent=11 // pred_check_branch
          %215 = sbr.rel (%p213) target = $region16
        $region15: #{tpu_custom_call.1} parent=11 // pred_region
          _
        $region16: #{tpu_custom_call.1} parent=11 // pred_fallthru
          _
        // Predicated region
        $region17: #{tpu_custom_call.1} parent=11 // pred_check
          %p216 = pneg %p128
        $region18: #{tpu_custom_call.1} parent=11 // pred_check_branch
          %218 = sbr.rel (%p216) target = $region20
        $region19: #{tpu_custom_call.1} parent=11 // pred_region
          _
        $region20: #{tpu_custom_call.1} parent=11 // pred_fallthru
          _
        // Predicated region
        $region21: #{tpu_custom_call.1} parent=11 // pred_check
          %p219 = pneg %p149
        $region22: #{tpu_custom_call.1} parent=11 // pred_check_branch
          %221 = sbr.rel (%p219) target = $region24
        $region23: #{tpu_custom_call.1} parent=11 // pred_region
          _
        $region24: #{tpu_custom_call.1} parent=11 // pred_fallthru
          _
        // Predicated region
        $region25: #{tpu_custom_call.1} parent=11 // pred_check
          %p222 = pneg %p170
        $region26: #{tpu_custom_call.1} parent=11 // pred_check_branch
          %224 = sbr.rel (%p222) target = $region28
        $region27: #{tpu_custom_call.1} parent=11 // pred_region
          _
        $region28: #{tpu_custom_call.1} parent=11 // pred_fallthru
          _
      $region12: #{tpu_custom_call.1} parent=5 // pred_fallthru
        _
      %p225 = scmp.lt.s32.totalorder %s18, 4
      // Predicated region
      $region29: #{tpu_custom_call.1} parent=5 // pred_check
        %p226 = pneg %p225
      $region30: #{tpu_custom_call.1} parent=5 // pred_check_branch
        %228 = sbr.rel (%p226) target = $region32
      $region31: #{tpu_custom_call.1} parent=5 // pred_region
        // Predicated region
        $region33: #{tpu_custom_call.1} parent=31 // pred_check
          %p229 = pneg %p52
        $region34: #{tpu_custom_call.1} parent=31 // pred_check_branch
          %231 = sbr.rel (%p229) target = $region36
        $region35: #{tpu_custom_call.1} parent=31 // pred_region
          %s232 = sand.u32 %s42, 1
          %s233 = scalar_lea.sflag [#allocation4], %s232
          %s234 = sand.u32 %s42, 1
          %s235 = smul.addr %s234, 8
          %s236 = scalar_lea.vmem [#allocation3], %s235
          %s237 = smul.u32 2, %s26
          %s238 = ssub.s32 5, %s237
          %p239 = scmp.lt.s32.totalorder %s238, 2
          %s240 = scalar_select %p239, %s238, 2
          %s241 = smul.u32 64, %s240
          %s243 = ssub.s32 128, %s241
          %244 = vsyncadd %s233, %s243
          %p245 = scmp.ne.s32.totalorder 0, %s241
          %s246 = smul.addr %s25, 5
          %s247 = sadd.s32 %s237, %s246
          %s248 = smul.addr %s247, 64
          %s249 = scalar_lea.hbm %s0, %s248
          %s250 = smul.u32 %s240, 4
          %s251 = sshll.u32 %s250, 4
          %s252 = sshll.u32 %s236, 4
          %s253 = int_to_ptr.vmem [resolvable:$true] %s252
          %255 = dma.hbm_to_vmem [thread:$0]  (%p245), %s249, %s251, %s253, %s233
        $region36: #{tpu_custom_call.1} parent=31 // pred_fallthru
          _
        // Predicated region
        $region37: #{tpu_custom_call.1} parent=31 // pred_check
          %p256 = pneg %p80
        $region38: #{tpu_custom_call.1} parent=31 // pred_check_branch
          %258 = sbr.rel (%p256) target = $region40
        $region39: #{tpu_custom_call.1} parent=31 // pred_region
          %p259 = scmp.lt.s32.totalorder %s25, 1
          %s260 = scalar_select %p259, %s25, 1
          %p261 = scmp.lt.s32.totalorder %s26, 1
          %s262 = scalar_select %p261, %s26, 1
          %s263 = smul.addr %s260, 2
          %s264 = sadd.s32 %s262, %s263
          %s265 = smul.addr %s264, 4
          %s266 = scalar_lea.vmem %s1, %s265
        $region40: #{tpu_custom_call.1} parent=31 // pred_fallthru
          _
      $region32: #{tpu_custom_call.1} parent=5 // pred_fallthru
        _
      %p267 = scmp.le.s32.totalorder 1, %s18
      %p268 = scmp.lt.s32.totalorder %s18, 5
      %p269 = pnand %p267, %p268
      %p270 = pneg %p269
      // Predicated region
      $region41: #{tpu_custom_call.1} parent=5 // pred_check
        _
      $region42: #{tpu_custom_call.1} parent=5 // pred_check_branch
        %272 = sbr.rel (%p269) target = $region44
      $region43: #{tpu_custom_call.1} parent=5 // pred_region
        %s273 = ssub.s32 %s18, 1
        %s274 = sand.u32 %s45, 1
        %s275 = scalar_lea.sflag [#allocation4], %s274
        %s276 = sand.u32 %s45, 1
        %s277 = smul.addr %s276, 8
        %s278 = scalar_lea.vmem [#allocation3], %s277
        // Predicated region
        $region45: #{tpu_custom_call.1} parent=43 // pred_check
          %p279 = pneg %p58
        $region46: #{tpu_custom_call.1} parent=43 // pred_check_branch
          %281 = sbr.rel (%p279) target = $region48
        $region47: #{tpu_custom_call.1} parent=43 // pred_region
          %282 = dma.done %s275, 128
        $region48: #{tpu_custom_call.1} parent=43 // pred_fallthru
          _
        %s283 = sand.u32 %s45, 1
        %s284 = scalar_lea.sflag [#allocation4], %s283
        %s285 = sand.u32 %s45, 1
        %s286 = smul.addr %s285, 8
        %s287 = scalar_lea.vmem [#allocation3], %s286
        %p288 = pneg %p58
        %p289 = pneg %p55
        %p290 = scmp.lt.s32.totalorder %s27, 1
        %s291 = scalar_select %p290, %s27, 1
        %p292 = scmp.lt.s32.totalorder %s28, 1
        %s293 = scalar_select %p292, %s28, 1
        %s294 = smul.addr %s291, 2
        %s295 = sadd.s32 %s293, %s294
        %s296 = smul.addr %s295, 4
        %s297 = scalar_lea.vmem %s1, %s296
        %p298 = pneg %p86
        %p299 = pneg %p83
        %p300 = pneg %p107
        %p301 = pneg %p104
        %p302 = pneg %p128
        %p303 = pneg %p125
        %p304 = pneg %p149
        %p305 = pneg %p146
        %p306 = pneg %p170
        %p307 = pneg %p167
        %p308 = pneg %p198
        %p309 = pneg %p195
        %s310 = sand.u32 %s185, 1
        %s311 = scalar_lea.sflag [#allocation5], %s310
        %s312 = sand.u32 %s185, 1
        %s313 = smul.addr %s312, 16
        %s314 = scalar_lea.vmem [#allocation6], %s313
        %s315 = smul.u32 2, %s28
        %s316 = ssub.s32 5, %s315
        %p317 = scmp.lt.s32.totalorder %s316, 2
        %s318 = scalar_select %p317, %s316, 2
        %s319 = smul.u32 64, %s318
        %p320 = scmp.lt.s32.totalorder %s27, 1
        %s321 = scalar_select %p320, %s27, 1
        %p322 = scmp.lt.s32.totalorder %s28, 1
        %s323 = scalar_select %p322, %s28, 1
        %s324 = smul.addr %s321, 2
        %s325 = sadd.s32 %s323, %s324
        %s326 = smul.addr %s325, 4
        %s327 = scalar_lea.vmem %s1, %s326
        %s328 = smul.u32 2, %s28
        %v329 = vld [vmem:[%s278] sm:$0xff]
        %v331 = vcombine.high %v329, %v329
        %333 = vst [vmem:[#allocation2] sm:$0xf] %v329
        %334 = vst [vmem:[#allocation2 + $0x8] sm:$0xf] %v331
        %v335 = vld [vmem:[%s327] sm:$0xf]
        %vm336 = vcmask 519168
        %337 = vst.msk [vmem:[#allocation2 + $0x10] sm:$0xf] %vm336, %v335
        %v338 = vld [vmem:[%s278] sm:$0xff]
        %v340 = vcombine.low %v338, %v338
        %341 = vrot.lane.b32.xlu0 %v340, 127
        %v342 = vpop.permute.xlu0 %341
        %343 = vrot.lane.b32.xlu0 %v338, 127
        %v344 = vpop.permute.xlu0 %343
        %vm345 = vcmask 1039360
        %v346 = vsel %vm345, %v342, %v344
        %349 = vst [vmem:[#allocation2] sm:$0xf0] %v346
        %vm350 = vcmask 1039364
        %351 = vst.msk [vmem:[#allocation2 + $0x8] sm:$0xf0] %vm350, %v344
        %v352 = vld [vmem:[%s327] sm:$0xf]
        %v354 = vrot.slane %v352, 4
        %355 = vrot.lane.b32.xlu0 %v354, 127
        %v356 = vpop.permute.xlu0 %355
        %vm358 = vcmask 1048572
        %359 = vst.msk [vmem:[#allocation2 + $0x8] sm:$0xf0] %vm358, %v356
        %vm360 = vcmask 523268
        %361 = vst.msk [vmem:[#allocation2 + $0x10] sm:$0xf0] %vm360, %v356
        %v362 = vld [vmem:[%s278] sm:$0xff]
        %v364 = vcombine.high %v362, %v362
        %365 = vrot.lane.b32.xlu0 %v362, 126
        %v366 = vpop.permute.xlu0 %365
        %367 = vrot.lane.b32.xlu0 %v364, 126
        %v368 = vpop.permute.xlu0 %367
        %vm369 = vcmask 1031168
        %v370 = vsel %vm369, %v366, %v368
        %373 = vst [vmem:[#allocation2 + $0x18] sm:$0xf] %v370
        %vm374 = vcmask 1027072
        %375 = vst.msk [vmem:[#allocation2 + $0x20] sm:$0xf] %vm374, %v368
        %v376 = vld [vmem:[%s327] sm:$0xf]
        %378 = vrot.lane.b32.xlu0 %v376, 126
        %v379 = vpop.permute.xlu0 %378
        %vm381 = vcmask 1044464
        %382 = vst.msk [vmem:[#allocation2 + $0x20] sm:$0xf] %vm381, %v379
        %383 = vst.msk [vmem:[#allocation2 + $0x28] sm:$0xf] %vm336, %v379
        %v384 = vld [vmem:[%s2] sm:$0xf]
        %v385 = vld [vmem:[#allocation2] sm:$0xff]
        %v386 = vld [vmem:[#allocation2 + $0x8] sm:$0xff]
        %v387 = vld [vmem:[#allocation2 + $0x18] sm:$0xf]
        %v388 = vld [vmem:[#allocation2 + $0x20] sm:$0xf]
        %s389 = scalar_lea.vmem %s2, 4
        %v390 = vld [vmem:[%s389] sm:$0xf]
        %v391 = vld [vmem:[#allocation2 + $0x10] sm:$0xff]
        %v392 = vld [vmem:[#allocation2 + $0x28] sm:$0xf]
        %399 = vrot.lane.b32.xlu0 %v385, 96
        %v400 = vpop.permute.xlu0 %399
        %401 = vrot.lane.b32.xlu0 %v386, 96
        %v402 = vpop.permute.xlu0 %401
        %403 = vrot.lane.b32.xlu0 %v391, 96
        %v404 = vpop.permute.xlu0 %403
        %405 = vrot.lane.b32.xlu0 %v387, 96
        %v406 = vpop.permute.xlu0 %405
        %407 = vrot.lane.b32.xlu0 %v388, 96
        %v408 = vpop.permute.xlu0 %407
        %409 = vrot.lane.b32.xlu0 %v392, 96
        %v410 = vpop.permute.xlu0 %409
        %vm411 = vcmask 785408
        %v412 = vsel %vm411, %v400, %v402
        %v413 = vsel %vm411, %v402, %v404
        %v414 = vsel %vm411, %v406, %v408
        %v415 = vsel %vm411, %v408, %v410
        %vm418 = vcmask 97280
        %v420 = vsel %vm418, %v390, 0
        %vm422 = vcmask 1043456
        %v423 = vsel %vm422, %v414, 0
        %v425 = vsel %vm422, %v415, 0
        %427 = vmatprep.subr.mxu0 %v413
        %428 = vmatpush1.msra.mxu0 %v412
        %429 = vmatprep.subr.mxu0 %v425
        %430 = vmatpush1.msra.mxu0 %v423
        %431 = vmatprep.subr.mxu0 0.0
        %432 = vmatpush1.msra.mxu0 0.0
        %433 = vmatprep.subr.mxu0 0.0
        %434 = vmatpush1.msra.mxu0 0.0
        %435 = vmatprep.subr.mxu0 0.0
        %436 = vmatpush1.msra.mxu0 0.0
        %437 = vmatprep.subr.mxu0 0.0
        %438 = vmatpush1.msra.mxu0 0.0
        %439 = vmatprep.subr.mxu0 0.0
        %440 = vmatpush1.msra.mxu0 0.0
        %441 = vmatprep.subr.mxu0 0.0
        %442 = vmatpush1.msra.mxu0 0.0
        %443 = vmatprep.subr.mxu0 0.0
        %444 = vmatpush1.msra.mxu0 0.0
        %445 = vmatprep.subr.mxu0 0.0
        %446 = vmatpush1.msra.mxu0 0.0
        %447 = vmatprep.subr.mxu0 0.0
        %448 = vmatpush1.msra.mxu0 0.0
        %449 = vmatprep.subr.mxu0 0.0
        %450 = vmatpush1.msra.mxu0 0.0
        %451 = vmatprep.subr.mxu0 0.0
        %452 = vmatpush1.msra.mxu0 0.0
        %453 = vmatprep.subr.mxu0 0.0
        %454 = vmatpush1.msra.mxu0 0.0
        %455 = vmatprep.subr.mxu0 0.0
        %456 = vmatpush1.msra.mxu0 0.0
        %457 = vmatprep.subr.mxu0 0.0
        %458 = vmatpush1.msra.mxu0 0.0
        %459 = vmatprep.subr.mxu0 0.0
        %460 = vmatpush1.msra.mxu0 0.0
        %461 = vmatprep.subr.mxu0 0.0
        %462 = vmatpush1.msra.mxu0 0.0
        %463 = vmatprep.subr.mxu0 0.0
        %464 = vmatpush1.msra.mxu0 0.0
        %465 = vmatprep.subr.mxu0 0.0
        %466 = vmatpush1.msra.mxu0 0.0
        %467 = vmatprep.subr.mxu0 0.0
        %468 = vmatpush1.msra.mxu0 0.0
        %469 = vmatprep.subr.mxu0 0.0
        %470 = vmatpush1.msra.mxu0 0.0
        %471 = vmatprep.subr.mxu0 0.0
        %472 = vmatpush1.msra.mxu0 0.0
        %473 = vmatprep.subr.mxu0 0.0
        %474 = vmatpush1.msra.mxu0 0.0
        %475 = vmatprep.subr.mxu0 0.0
        %476 = vmatpush1.msra.mxu0 0.0
        %477 = vmatprep.subr.mxu0 0.0
        %478 = vmatpush1.msra.mxu0 0.0
        %479 = vmatprep.subr.mxu0 0.0
        %480 = vmatpush1.msra.mxu0 0.0
        %481 = vmatprep.subr.mxu0 0.0
        %482 = vmatpush1.msra.mxu0 0.0
        %483 = vmatprep.subr.mxu0 0.0
        %484 = vmatpush1.msra.mxu0 0.0
        %485 = vmatprep.subr.mxu0 0.0
        %486 = vmatpush1.msra.mxu0 0.0
        %487 = vmatprep.subr.mxu0 0.0
        %488 = vmatpush1.msra.mxu0 0.0
        %489 = vmatprep.subr.mxu0 0.0
        %490 = vmatpush1.msra.mxu0 0.0
        %491 = vmatprep.mubr.f32.mxu0 0.0
        %492 = vmatmul.mubr.f32.gmra.mrb[0].mxu0 %v420
        %v493 = vpop.f32.mrb[0].mxu0
        %v494 = vadd.f32 0.0, %v493
        %v495 = vpop.f32.mrb[0].mxu0
        %v496 = vadd.f32 0.0, %v495
        %497 = vdwg.mxu0
        %v499 = vsel %vm418, %v384, 0
        %v501 = vsel %vm422, %v387, 0
        %v503 = vsel %vm422, %v388, 0
        %505 = vmatprep.subr.mxu0 %v386
        %506 = vmatpush1.msra.mxu0 %v385
        %507 = vmatprep.subr.mxu0 %v503
        %508 = vmatpush1.msra.mxu0 %v501
        %509 = vmatprep.subr.mxu0 0.0
        %510 = vmatpush1.msra.mxu0 0.0
        %511 = vmatprep.subr.mxu0 0.0
        %512 = vmatpush1.msra.mxu0 0.0
        %513 = vmatprep.subr.mxu0 0.0
        %514 = vmatpush1.msra.mxu0 0.0
        %515 = vmatprep.subr.mxu0 0.0
        %516 = vmatpush1.msra.mxu0 0.0
        %517 = vmatprep.subr.mxu0 0.0
        %518 = vmatpush1.msra.mxu0 0.0
        %519 = vmatprep.subr.mxu0 0.0
        %520 = vmatpush1.msra.mxu0 0.0
        %521 = vmatprep.subr.mxu0 0.0
        %522 = vmatpush1.msra.mxu0 0.0
        %523 = vmatprep.subr.mxu0 0.0
        %524 = vmatpush1.msra.mxu0 0.0
        %525 = vmatprep.subr.mxu0 0.0
        %526 = vmatpush1.msra.mxu0 0.0
        %527 = vmatprep.subr.mxu0 0.0
        %528 = vmatpush1.msra.mxu0 0.0
        %529 = vmatprep.subr.mxu0 0.0
        %530 = vmatpush1.msra.mxu0 0.0
        %531 = vmatprep.subr.mxu0 0.0
        %532 = vmatpush1.msra.mxu0 0.0
        %533 = vmatprep.subr.mxu0 0.0
        %534 = vmatpush1.msra.mxu0 0.0
        %535 = vmatprep.subr.mxu0 0.0
        %536 = vmatpush1.msra.mxu0 0.0
        %537 = vmatprep.subr.mxu0 0.0
        %538 = vmatpush1.msra.mxu0 0.0
        %539 = vmatprep.subr.mxu0 0.0
        %540 = vmatpush1.msra.mxu0 0.0
        %541 = vmatprep.subr.mxu0 0.0
        %542 = vmatpush1.msra.mxu0 0.0
        %543 = vmatprep.subr.mxu0 0.0
        %544 = vmatpush1.msra.mxu0 0.0
        %545 = vmatprep.subr.mxu0 0.0
        %546 = vmatpush1.msra.mxu0 0.0
        %547 = vmatprep.subr.mxu0 0.0
        %548 = vmatpush1.msra.mxu0 0.0
        %549 = vmatprep.subr.mxu0 0.0
        %550 = vmatpush1.msra.mxu0 0.0
        %551 = vmatprep.subr.mxu0 0.0
        %552 = vmatpush1.msra.mxu0 0.0
        %553 = vmatprep.subr.mxu0 0.0
        %554 = vmatpush1.msra.mxu0 0.0
        %555 = vmatprep.subr.mxu0 0.0
        %556 = vmatpush1.msra.mxu0 0.0
        %557 = vmatprep.subr.mxu0 0.0
        %558 = vmatpush1.msra.mxu0 0.0
        %559 = vmatprep.subr.mxu0 0.0
        %560 = vmatpush1.msra.mxu0 0.0
        %561 = vmatprep.subr.mxu0 0.0
        %562 = vmatpush1.msra.mxu0 0.0
        %563 = vmatprep.subr.mxu0 0.0
        %564 = vmatpush1.msra.mxu0 0.0
        %565 = vmatprep.subr.mxu0 0.0
        %566 = vmatpush1.msra.mxu0 0.0
        %567 = vmatprep.subr.mxu0 0.0
        %568 = vmatpush1.msra.mxu0 0.0
        %569 = vmatprep.mubr.f32.mxu0 0.0
        %570 = vmatmul.mubr.f32.gmra.mrb[0].mxu0 %v499
        %v571 = vpop.f32.mrb[0].mxu0
        %v572 = vadd.f32 %v494, %v571
        %v573 = vpop.f32.mrb[0].mxu0
        %v574 = vadd.f32 %v496, %v573
        %575 = vdwg.mxu0
        %s576 = scalar_lea.vmem %s2, 8
        %v577 = vld [vmem:[%s576] sm:$0xf]
        %578 = vrot.lane.b32.xlu0 %v385, 64
        %v579 = vpop.permute.xlu0 %578
        %580 = vrot.lane.b32.xlu0 %v386, 64
        %v581 = vpop.permute.xlu0 %580
        %582 = vrot.lane.b32.xlu0 %v391, 64
        %v583 = vpop.permute.xlu0 %582
        %584 = vrot.lane.b32.xlu0 %v387, 64
        %v585 = vpop.permute.xlu0 %584
        %586 = vrot.lane.b32.xlu0 %v388, 64
        %v587 = vpop.permute.xlu0 %586
        %588 = vrot.lane.b32.xlu0 %v392, 64
        %v589 = vpop.permute.xlu0 %588
        %vm590 = vcmask 523264
        %v591 = vsel %vm590, %v579, %v581
        %v592 = vsel %vm590, %v581, %v583
        %v593 = vsel %vm590, %v585, %v587
        %v594 = vsel %vm590, %v587, %v589
        %v598 = vsel %vm418, %v577, 0
        %v600 = vsel %vm422, %v593, 0
        %v602 = vsel %vm422, %v594, 0
        %604 = vmatprep.subr.mxu0 %v592
        %605 = vmatpush1.msra.mxu0 %v591
        %606 = vmatprep.subr.mxu0 %v602
        %607 = vmatpush1.msra.mxu0 %v600
        %608 = vmatprep.subr.mxu0 0.0
        %609 = vmatpush1.msra.mxu0 0.0
        %610 = vmatprep.subr.mxu0 0.0
        %611 = vmatpush1.msra.mxu0 0.0
        %612 = vmatprep.subr.mxu0 0.0
        %613 = vmatpush1.msra.mxu0 0.0
        %614 = vmatprep.subr.mxu0 0.0
        %615 = vmatpush1.msra.mxu0 0.0
        %616 = vmatprep.subr.mxu0 0.0
        %617 = vmatpush1.msra.mxu0 0.0
        %618 = vmatprep.subr.mxu0 0.0
        %619 = vmatpush1.msra.mxu0 0.0
        %620 = vmatprep.subr.mxu0 0.0
        %621 = vmatpush1.msra.mxu0 0.0
        %622 = vmatprep.subr.mxu0 0.0
        %623 = vmatpush1.msra.mxu0 0.0
        %624 = vmatprep.subr.mxu0 0.0
        %625 = vmatpush1.msra.mxu0 0.0
        %626 = vmatprep.subr.mxu0 0.0
        %627 = vmatpush1.msra.mxu0 0.0
        %628 = vmatprep.subr.mxu0 0.0
        %629 = vmatpush1.msra.mxu0 0.0
        %630 = vmatprep.subr.mxu0 0.0
        %631 = vmatpush1.msra.mxu0 0.0
        %632 = vmatprep.subr.mxu0 0.0
        %633 = vmatpush1.msra.mxu0 0.0
        %634 = vmatprep.subr.mxu0 0.0
        %635 = vmatpush1.msra.mxu0 0.0
        %636 = vmatprep.subr.mxu0 0.0
        %637 = vmatpush1.msra.mxu0 0.0
        %638 = vmatprep.subr.mxu0 0.0
        %639 = vmatpush1.msra.mxu0 0.0
        %640 = vmatprep.subr.mxu0 0.0
        %641 = vmatpush1.msra.mxu0 0.0
        %642 = vmatprep.subr.mxu0 0.0
        %643 = vmatpush1.msra.mxu0 0.0
        %644 = vmatprep.subr.mxu0 0.0
        %645 = vmatpush1.msra.mxu0 0.0
        %646 = vmatprep.subr.mxu0 0.0
        %647 = vmatpush1.msra.mxu0 0.0
        %648 = vmatprep.subr.mxu0 0.0
        %649 = vmatpush1.msra.mxu0 0.0
        %650 = vmatprep.subr.mxu0 0.0
        %651 = vmatpush1.msra.mxu0 0.0
        %652 = vmatprep.subr.mxu0 0.0
        %653 = vmatpush1.msra.mxu0 0.0
        %654 = vmatprep.subr.mxu0 0.0
        %655 = vmatpush1.msra.mxu0 0.0
        %656 = vmatprep.subr.mxu0 0.0
        %657 = vmatpush1.msra.mxu0 0.0
        %658 = vmatprep.subr.mxu0 0.0
        %659 = vmatpush1.msra.mxu0 0.0
        %660 = vmatprep.subr.mxu0 0.0
        %661 = vmatpush1.msra.mxu0 0.0
        %662 = vmatprep.subr.mxu0 0.0
        %663 = vmatpush1.msra.mxu0 0.0
        %664 = vmatprep.subr.mxu0 0.0
        %665 = vmatpush1.msra.mxu0 0.0
        %666 = vmatprep.subr.mxu0 0.0
        %667 = vmatpush1.msra.mxu0 0.0
        %668 = vmatprep.mubr.f32.mxu0 0.0
        %669 = vmatmul.mubr.f32.gmra.mrb[0].mxu0 %v598
        %v670 = vpop.f32.mrb[0].mxu0
        %v671 = vadd.f32 0.0, %v670
        %v672 = vpop.f32.mrb[0].mxu0
        %v673 = vadd.f32 0.0, %v672
        %674 = vdwg.mxu0
        %v675 = vadd.f32 %v572, %v671
        %v676 = vadd.f32 %v574, %v673
        %v677 = vld [vmem:[%s3] sm:$0xf]
        %679 = vset.pattern.permute.xlu0 0
        %680 = vperm.xlu0 %679, %v677
        %v681 = vpop.permute.xlu0 %680
        %v683 = vadd.f32 %v675, %v681
        %v684 = vadd.f32 %v676, %v681
        %v685 = vmax.f32 %v683, 0.0
        %v686 = vmax.f32 %v684, 0.0
        %v687 = vld [vmem:[%s4] sm:$0xff]
        %v688 = vld [vmem:[%s5] sm:$0xff]
        %690 = vset.pattern.permute.xlu0 0
        %691 = vperm.xlu0 %690, %v688
        %v692 = vpop.permute.xlu0 %691
        %vm694 = vcmask 31744
        %v696 = vsel %vm694, %v687, 0
        %v699 = vsel %vm422, %v685, 0
        %v702 = vsel %vm422, %v686, 0
        %704 = vmatprep.subr.mxu0 %v702
        %705 = vmatpush1.msra.mxu0 %v699
        %706 = vmatprep.subr.mxu0 0.0
        %707 = vmatpush1.msra.mxu0 0.0
        %708 = vmatprep.subr.mxu0 0.0
        %709 = vmatpush1.msra.mxu0 0.0
        %710 = vmatprep.subr.mxu0 0.0
        %711 = vmatpush1.msra.mxu0 0.0
        %712 = vmatprep.subr.mxu0 0.0
        %713 = vmatpush1.msra.mxu0 0.0
        %714 = vmatprep.subr.mxu0 0.0
        %715 = vmatpush1.msra.mxu0 0.0
        %716 = vmatprep.subr.mxu0 0.0
        %717 = vmatpush1.msra.mxu0 0.0
        %718 = vmatprep.subr.mxu0 0.0
        %719 = vmatpush1.msra.mxu0 0.0
        %720 = vmatprep.subr.mxu0 0.0
        %721 = vmatpush1.msra.mxu0 0.0
        %722 = vmatprep.subr.mxu0 0.0
        %723 = vmatpush1.msra.mxu0 0.0
        %724 = vmatprep.subr.mxu0 0.0
        %725 = vmatpush1.msra.mxu0 0.0
        %726 = vmatprep.subr.mxu0 0.0
        %727 = vmatpush1.msra.mxu0 0.0
        %728 = vmatprep.subr.mxu0 0.0
        %729 = vmatpush1.msra.mxu0 0.0
        %730 = vmatprep.subr.mxu0 0.0
        %731 = vmatpush1.msra.mxu0 0.0
        %732 = vmatprep.subr.mxu0 0.0
        %733 = vmatpush1.msra.mxu0 0.0
        %734 = vmatprep.subr.mxu0 0.0
        %735 = vmatpush1.msra.mxu0 0.0
        %736 = vmatprep.subr.mxu0 0.0
        %737 = vmatpush1.msra.mxu0 0.0
        %738 = vmatprep.subr.mxu0 0.0
        %739 = vmatpush1.msra.mxu0 0.0
        %740 = vmatprep.subr.mxu0 0.0
        %741 = vmatpush1.msra.mxu0 0.0
        %742 = vmatprep.subr.mxu0 0.0
        %743 = vmatpush1.msra.mxu0 0.0
        %744 = vmatprep.subr.mxu0 0.0
        %745 = vmatpush1.msra.mxu0 0.0
        %746 = vmatprep.subr.mxu0 0.0
        %747 = vmatpush1.msra.mxu0 0.0
        %748 = vmatprep.subr.mxu0 0.0
        %749 = vmatpush1.msra.mxu0 0.0
        %750 = vmatprep.subr.mxu0 0.0
        %751 = vmatpush1.msra.mxu0 0.0
        %752 = vmatprep.subr.mxu0 0.0
        %753 = vmatpush1.msra.mxu0 0.0
        %754 = vmatprep.subr.mxu0 0.0
        %755 = vmatpush1.msra.mxu0 0.0
        %756 = vmatprep.subr.mxu0 0.0
        %757 = vmatpush1.msra.mxu0 0.0
        %758 = vmatprep.subr.mxu0 0.0
        %759 = vmatpush1.msra.mxu0 0.0
        %760 = vmatprep.subr.mxu0 0.0
        %761 = vmatpush1.msra.mxu0 0.0
        %762 = vmatprep.subr.mxu0 0.0
        %763 = vmatpush1.msra.mxu0 0.0
        %764 = vmatprep.subr.mxu0 0.0
        %765 = vmatpush1.msra.mxu0 0.0
        %766 = vmatprep.subr.mxu0 0.0
        %767 = vmatpush1.msra.mxu0 0.0
        %768 = vmatprep.mubr.f32.mxu0 0.0
        %769 = vmatmul.mubr.f32.gmra.mrb[0].mxu0 %v696
        %v770 = vpop.f32.mrb[0].mxu0
        %v771 = vadd.f32 %v692, %v770
        %v772 = vpop.f32.mrb[0].mxu0
        %v773 = vadd.f32 %v692, %v772
        %774 = vdwg.mxu0
        %775 = vst [vmem:[%s314] sm:$0xff] %v771
        %776 = vst [vmem:[%s314 + $0x8] sm:$0xff] %v773
        %s777 = sand.u32 %s185, 1
        %s778 = scalar_lea.sflag [#allocation5], %s777
        %s779 = sand.u32 %s185, 1
        %s780 = smul.addr %s779, 16
        %s781 = scalar_lea.vmem [#allocation6], %s780
        // Predicated region
        $region49: #{tpu_custom_call.1} parent=43 // pred_check
          %p782 = pneg %p195
        $region50: #{tpu_custom_call.1} parent=43 // pred_check_branch
          %784 = sbr.rel (%p782) target = $region52
        $region51: #{tpu_custom_call.1} parent=43 // pred_region
          %s785 = smul.u32 2, %s28
          %s787 = ssub.s32 256, 256
          %788 = vsyncadd %s778, %s787
          %s789 = smul.addr %s27, 4
          %s790 = sadd.s32 %s785, %s789
          %s791 = smul.addr %s790, 128
          %s792 = scalar_lea.hbm %s6, %s791
          %s794 = sshll.u32 %s781, 4
          %s795 = int_to_ptr.vmem [resolvable:$true] %s794
          %797 = dma.vmem_to_hbm [thread:$0]  %s795, 256, %s792, %s778
        $region52: #{tpu_custom_call.1} parent=43 // pred_fallthru
          _
      $region44: #{tpu_custom_call.1} parent=5 // pred_fallthru
        _
      %p798 = scmp.le.s32.totalorder 2, %s18
      // Predicated region
      $region53: #{tpu_custom_call.1} parent=5 // pred_check
        %p799 = pneg %p798
      $region54: #{tpu_custom_call.1} parent=5 // pred_check_branch
        %801 = sbr.rel (%p799) target = $region56
      $region55: #{tpu_custom_call.1} parent=5 // pred_region
        %s802 = ssub.s32 %s18, 2
        // Predicated region
        $region57: #{tpu_custom_call.1} parent=55 // pred_check
          %p803 = pneg %p201
        $region58: #{tpu_custom_call.1} parent=55 // pred_check_branch
          %805 = sbr.rel (%p803) target = $region60
        $region59: #{tpu_custom_call.1} parent=55 // pred_region
          %s806 = sand.u32 %s186, 1
          %s807 = scalar_lea.sflag [#allocation5], %s806
          %s808 = sand.u32 %s186, 1
          %s809 = smul.addr %s808, 16
          %s810 = scalar_lea.vmem [#allocation6], %s809
          %811 = dma.done %s807, 256
        $region60: #{tpu_custom_call.1} parent=55 // pred_fallthru
          _
      $region56: #{tpu_custom_call.1} parent=5 // pred_fallthru
        _
    $region6: #{tpu_custom_call.1} parent=1 // loop_footer
      %s22 = sadd.s32 1, %s18
    $region7: #{tpu_custom_call.1} parent=1 // loop_footer_branch
      %17 = sbr.rel target = $region3
    $region8: #{tpu_custom_call.1} parent=1 // loop_exit
      _
    %812 = vsyncpa [#allocation4], 1
    %s813 = scalar_lea.sflag [#allocation4], 1
    %814 = vsyncpa %s813, 1
    %815 = vsyncpa [#allocation5], 1
    %s816 = scalar_lea.sflag [#allocation5], 1
    %817 = vsyncpa %s816, 1

// kernel: tpu_custom_call.1
$region0: #{tpu_custom_call.1}
  #allocation0 [shape = 'u32[]', space=smem, size = 0x4, offset = 0x4, fixed_abs, tag = 'smem constant byte address 0x4 - core index']
  #allocation1 [shape = 'u32[144,128]{1,0:T(1,128)}', space=vmem, size = 0x12000, scoped, tag = 'internal scratch']
  #allocation2 [shape = 'f32[12,320]{1,0:T(8,128)}', space=vmem, size = 0x6000, scoped, tag = 'scratch operand']
  %s0 = inlined_call_operand.hbm [shape: f32[2,4,608], index: 0, kind: input, shape index: {}]
  %s1 = inlined_call_operand.vmem [shape: f32[2,2,4,96], index: 1, kind: input, shape index: {}]
  %s2 = inlined_call_operand.vmem [shape: f32[3,4,12], index: 2, kind: input, shape index: {}]
  %s3 = inlined_call_operand.vmem [shape: f32[4,1], index: 3, kind: input, shape index: {}]
  %s4 = inlined_call_operand.vmem [shape: f32[8,4], index: 4, kind: input, shape index: {}]
  %s5 = inlined_call_operand.vmem [shape: f32[8,1], index: 5, kind: input, shape index: {}]
  %s6 = inlined_call_operand.hbm [shape: f32[2,8,512], index: 6, kind: output, shape index: {}]
  %s7 = sld [smem:[#allocation0]]
  $region61: #{tpu_custom_call.1} parent=0
    _
  %s9 = ssub.s32 1, %s7
  %s10 = scalar_select 0, %s9, %s7
  $region1: #{tpu_custom_call.1} parent=0
    #allocation3 [shape = 'u8[8192]{0}', space=vmem, size = 0x2000, scoped, tag = 'input window, operand 0']
    #allocation4 [shape = 's32[2]{0}', space=sflag, size = 0x8, scoped, tag = 'scoped memory for tpu_custom_call.1']
    #allocation5 [shape = 's32[2]{0}', space=sflag, size = 0x8, scoped, tag = 'scoped memory for tpu_custom_call.1']
    #allocation6 [shape = 'u8[16384]{0}', space=vmem, size = 0x4000, scoped, tag = 'output window, operand 0']
    %11 = vsyncpa [#allocation4], 0
    %s12 = scalar_lea.sflag [#allocation4], 1
    %13 = vsyncpa %s12, 0
    %14 = vsyncpa [#allocation5], 0
    %s15 = scalar_lea.sflag [#allocation5], 1
    %16 = vsyncpa %s15, 0
    loop: start=0, step=1, limit=6
    $region2: #{tpu_custom_call.1} parent=1 // loop_pre_header
      _
    $region3: #{tpu_custom_call.1} parent=1 // loop_header
      %s18 = sphi 0, %s22
      %p19 = scmp.ge.s32.totalorder %s18, 6
      %s25 = sphi 0, %s37
      %s26 = sphi 0, %s33
      %s27 = sphi 0, %s25
      %s28 = sphi 0, %s26
      %s29 = sphi 0, %s27
      %s30 = sphi 0, %s28
      %s42 = sphi 0, %s44
      %s45 = sphi 0, %s42
      %s46 = sphi 0, %s45
      %s62 = sphi 0, %s46
      %s70 = sphi 0, %s72
      %s73 = sphi 0, %s70
      %s74 = sphi 0, %s73
      %s90 = sphi 0, %s74
      %s94 = sphi 0, %s94
      %s96 = sphi 0, %s94
      %s97 = sphi 0, %s96
      %s111 = sphi 0, %s97
      %s115 = sphi 0, %s115
      %s117 = sphi 0, %s115
      %s118 = sphi 0, %s117
      %s132 = sphi 0, %s118
      %s136 = sphi 0, %s136
      %s138 = sphi 0, %s136
      %s139 = sphi 0, %s138
      %s153 = sphi 0, %s139
      %s157 = sphi 0, %s157
      %s159 = sphi 0, %s157
      %s160 = sphi 0, %s159
      %s174 = sphi 0, %s160
      %s182 = sphi 0, %s184
      %s185 = sphi 0, %s182
      %s186 = sphi 0, %s185
      %s202 = sphi 0, %s186
    $region4: #{tpu_custom_call.1} parent=1 // loop_header_branch
      %21 = sbr.rel (%p19) target = $region8
    $region5: #{tpu_custom_call.1} parent=1 // loop_body
      %s23 = ssub.s32 %s18, 1
      %s24 = ssub.s32 %s18, 2
      %s31 = sadd.s32 1, %s26
      %p32 = scmp.ge.s32.totalorder %s31, 2
      %s33 = scalar_select %p32, 0, %s31
      %s34 = sadd.s32 1, %s25
      %s35 = scalar_select %p32, %s34, %s25
      %p36 = scmp.ge.s32.totalorder %s35, 2
      %s37 = scalar_select %p36, 0, %s35
      %s38 = ssub.s32 %s25, %s37
      %s39 = ssub.s32 %s26, %s33
      %s40 = sor.u32 %s38, %s39
      %p41 = scmp.eq.s32.totalorder %s40, 0
      %s43 = sadd.s32 %s42, 1
      %s44 = scalar_select %p41, %s42, %s43
      %p47 = pneg %p41
      %p48 = scmp.eq.s32.totalorder %s18, 3
      %p49 = por %p47, %p48
      %p50 = scmp.ne.s32.totalorder %s42, %s45
      %p51 = scmp.eq.s32.totalorder %s18, 0
      %p52 = por %p50, %p51
      %p53 = scmp.ne.s32.totalorder %s42, %s45
      %p54 = scmp.eq.s32.totalorder %s23, 3
      %p55 = por %p53, %p54
      %p56 = scmp.ne.s32.totalorder %s45, %s46
      %p57 = scmp.eq.s32.totalorder %s23, 0
      %p58 = por %p56, %p57
      %p59 = scmp.ne.s32.totalorder %s45, %s46
      %p60 = scmp.eq.s32.totalorder %s24, 3
      %p61 = por %p59, %p60
      %p63 = scmp.ne.s32.totalorder %s46, %s62
      %p64 = scmp.eq.s32.totalorder %s24, 0
      %p65 = por %p63, %p64
      %s66 = ssub.s32 %s25, %s37
      %s67 = ssub.s32 %s26, %s33
      %s68 = sor.u32 %s66, %s67
      %p69 = scmp.eq.s32.totalorder %s68, 0
      %s71 = sadd.s32 %s70, 1
      %s72 = scalar_select %p69, %s70, %s71
      %p75 = pneg %p69
      %p76 = scmp.eq.s32.totalorder %s18, 3
      %p77 = por %p75, %p76
      %p78 = scmp.ne.s32.totalorder %s70, %s73
      %p79 = scmp.eq.s32.totalorder %s18, 0
      %p80 = por %p78, %p79
      %p81 = scmp.ne.s32.totalorder %s70, %s73
      %p82 = scmp.eq.s32.totalorder %s23, 3
      %p83 = por %p81, %p82
      %p84 = scmp.ne.s32.totalorder %s73, %s74
      %p85 = scmp.eq.s32.totalorder %s23, 0
      %p86 = por %p84, %p85
      %p87 = scmp.ne.s32.totalorder %s73, %s74
      %p88 = scmp.eq.s32.totalorder %s24, 3
      %p89 = por %p87, %p88
      %p91 = scmp.ne.s32.totalorder %s74, %s90
      %p92 = scmp.eq.s32.totalorder %s24, 0
      %p93 = por %p91, %p92
      %s95 = sadd.s32 %s94, 1
      %p98 = scmp.eq.s32.totalorder %s18, 3
      %p99 = scmp.ne.s32.totalorder %s94, %s96
      %p100 = scmp.eq.s32.totalorder %s18, 0
      %p101 = por %p99, %p100
      %p102 = scmp.ne.s32.totalorder %s94, %s96
      %p103 = scmp.eq.s32.totalorder %s23, 3
      %p104 = por %p102, %p103
      %p105 = scmp.ne.s32.totalorder %s96, %s97
      %p106 = scmp.eq.s32.totalorder %s23, 0
      %p107 = por %p105, %p106
      %p108 = scmp.ne.s32.totalorder %s96, %s97
      %p109 = scmp.eq.s32.totalorder %s24, 3
      %p110 = por %p108, %p109
      %p112 = scmp.ne.s32.totalorder %s97, %s111
      %p113 = scmp.eq.s32.totalorder %s24, 0
      %p114 = por %p112, %p113
      %s116 = sadd.s32 %s115, 1
      %p119 = scmp.eq.s32.totalorder %s18, 3
      %p120 = scmp.ne.s32.totalorder %s115, %s117
      %p121 = scmp.eq.s32.totalorder %s18, 0
      %p122 = por %p120, %p121
      %p123 = scmp.ne.s32.totalorder %s115, %s117
      %p124 = scmp.eq.s32.totalorder %s23, 3
      %p125 = por %p123, %p124
      %p126 = scmp.ne.s32.totalorder %s117, %s118
      %p127 = scmp.eq.s32.totalorder %s23, 0
      %p128 = por %p126, %p127
      %p129 = scmp.ne.s32.totalorder %s117, %s118
      %p130 = scmp.eq.s32.totalorder %s24, 3
      %p131 = por %p129, %p130
      %p133 = scmp.ne.s32.totalorder %s118, %s132
      %p134 = scmp.eq.s32.totalorder %s24, 0
      %p135 = por %p133, %p134
      %s137 = sadd.s32 %s136, 1
      %p140 = scmp.eq.s32.totalorder %s18, 3
      %p141 = scmp.ne.s32.totalorder %s136, %s138
      %p142 = scmp.eq.s32.totalorder %s18, 0
      %p143 = por %p141, %p142
      %p144 = scmp.ne.s32.totalorder %s136, %s138
      %p145 = scmp.eq.s32.totalorder %s23, 3
      %p146 = por %p144, %p145
      %p147 = scmp.ne.s32.totalorder %s138, %s139
      %p148 = scmp.eq.s32.totalorder %s23, 0
      %p149 = por %p147, %p148
      %p150 = scmp.ne.s32.totalorder %s138, %s139
      %p151 = scmp.eq.s32.totalorder %s24, 3
      %p152 = por %p150, %p151
      %p154 = scmp.ne.s32.totalorder %s139, %s153
      %p155 = scmp.eq.s32.totalorder %s24, 0
      %p156 = por %p154, %p155
      %s158 = sadd.s32 %s157, 1
      %p161 = scmp.eq.s32.totalorder %s18, 3
      %p162 = scmp.ne.s32.totalorder %s157, %s159
      %p163 = scmp.eq.s32.totalorder %s18, 0
      %p164 = por %p162, %p163
      %p165 = scmp.ne.s32.totalorder %s157, %s159
      %p166 = scmp.eq.s32.totalorder %s23, 3
      %p167 = por %p165, %p166
      %p168 = scmp.ne.s32.totalorder %s159, %s160
      %p169 = scmp.eq.s32.totalorder %s23, 0
      %p170 = por %p168, %p169
      %p171 = scmp.ne.s32.totalorder %s159, %s160
      %p172 = scmp.eq.s32.totalorder %s24, 3
      %p173 = por %p171, %p172
      %p175 = scmp.ne.s32.totalorder %s160, %s174
      %p176 = scmp.eq.s32.totalorder %s24, 0
      %p177 = por %p175, %p176
      %s178 = ssub.s32 %s25, %s37
      %s179 = ssub.s32 %s26, %s33
      %s180 = sor.u32 %s178, %s179
      %p181 = scmp.eq.s32.totalorder %s180, 0
      %s183 = sadd.s32 %s182, 1
      %s184 = scalar_select %p181, %s182, %s183
      %p187 = pneg %p181
      %p188 = scmp.eq.s32.totalorder %s18, 3
      %p189 = por %p187, %p188
      %p190 = scmp.ne.s32.totalorder %s182, %s185
      %p191 = scmp.eq.s32.totalorder %s18, 0
      %p192 = por %p190, %p191
      %p193 = scmp.ne.s32.totalorder %s182, %s185
      %p194 = scmp.eq.s32.totalorder %s23, 3
      %p195 = por %p193, %p194
      %p196 = scmp.ne.s32.totalorder %s185, %s186
      %p197 = scmp.eq.s32.totalorder %s23, 0
      %p198 = por %p196, %p197
      %p199 = scmp.ne.s32.totalorder %s185, %s186
      %p200 = scmp.eq.s32.totalorder %s24, 3
      %p201 = por %p199, %p200
      %p203 = scmp.ne.s32.totalorder %s186, %s202
      %p204 = scmp.eq.s32.totalorder %s24, 0
      %p205 = por %p203, %p204
      %p206 = scmp.le.s32.totalorder 1, %s18
      %p207 = scmp.lt.s32.totalorder %s18, 5
      %p208 = pnand %p206, %p207
      %p209 = pneg %p208
      // Predicated region
      $region9: #{tpu_custom_call.1} parent=5 // pred_check
        _
      $region10: #{tpu_custom_call.1} parent=5 // pred_check_branch
        %211 = sbr.rel (%p208) target = $region12
      $region11: #{tpu_custom_call.1} parent=5 // pred_region
        %s212 = ssub.s32 %s18, 1
        // Predicated region
        $region13: #{tpu_custom_call.1} parent=11 // pred_check
          %p213 = pneg %p107
        $region14: #{tpu_custom_call.1} parent=11 // pred_check_branch
          %215 = sbr.rel (%p213) target = $region16
        $region15: #{tpu_custom_call.1} parent=11 // pred_region
          _
        $region16: #{tpu_custom_call.1} parent=11 // pred_fallthru
          _
        // Predicated region
        $region17: #{tpu_custom_call.1} parent=11 // pred_check
          %p216 = pneg %p128
        $region18: #{tpu_custom_call.1} parent=11 // pred_check_branch
          %218 = sbr.rel (%p216) target = $region20
        $region19: #{tpu_custom_call.1} parent=11 // pred_region
          _
        $region20: #{tpu_custom_call.1} parent=11 // pred_fallthru
          _
        // Predicated region
        $region21: #{tpu_custom_call.1} parent=11 // pred_check
          %p219 = pneg %p149
        $region22: #{tpu_custom_call.1} parent=11 // pred_check_branch
          %221 = sbr.rel (%p219) target = $region24
        $region23: #{tpu_custom_call.1} parent=11 // pred_region
          _
        $region24: #{tpu_custom_call.1} parent=11 // pred_fallthru
          _
        // Predicated region
        $region25: #{tpu_custom_call.1} parent=11 // pred_check
          %p222 = pneg %p170
        $region26: #{tpu_custom_call.1} parent=11 // pred_check_branch
          %224 = sbr.rel (%p222) target = $region28
        $region27: #{tpu_custom_call.1} parent=11 // pred_region
          _
        $region28: #{tpu_custom_call.1} parent=11 // pred_fallthru
          _
      $region12: #{tpu_custom_call.1} parent=5 // pred_fallthru
        _
      %p225 = scmp.lt.s32.totalorder %s18, 4
      // Predicated region
      $region29: #{tpu_custom_call.1} parent=5 // pred_check
        %p226 = pneg %p225
      $region30: #{tpu_custom_call.1} parent=5 // pred_check_branch
        %228 = sbr.rel (%p226) target = $region32
      $region31: #{tpu_custom_call.1} parent=5 // pred_region
        // Predicated region
        $region33: #{tpu_custom_call.1} parent=31 // pred_check
          %p229 = pneg %p52
        $region34: #{tpu_custom_call.1} parent=31 // pred_check_branch
          %231 = sbr.rel (%p229) target = $region36
        $region35: #{tpu_custom_call.1} parent=31 // pred_region
          %s232 = sand.u32 %s42, 1
          %s233 = scalar_lea.sflag [#allocation4], %s232
          %s234 = sand.u32 %s42, 1
          %s235 = smul.addr %s234, 8
          %s236 = scalar_lea.vmem [#allocation3], %s235
          %s237 = smul.u32 2, %s26
          %s238 = ssub.s32 5, %s237
          %p239 = scmp.lt.s32.totalorder %s238, 2
          %s240 = scalar_select %p239, %s238, 2
          %s241 = smul.u32 64, %s240
          %s243 = ssub.s32 128, %s241
          %244 = vsyncadd %s233, %s243
          %p245 = scmp.ne.s32.totalorder 0, %s241
          %s246 = smul.addr %s25, 5
          %s247 = sadd.s32 %s237, %s246
          %s248 = smul.addr %s247, 64
          %s249 = scalar_lea.hbm %s0, %s248
          %s250 = smul.u32 %s240, 4
          %s251 = sshll.u32 %s250, 4
          %s252 = sshll.u32 %s236, 4
          %s253 = int_to_ptr.vmem [resolvable:$true] %s252
          %255 = dma.hbm_to_vmem [thread:$0]  (%p245), %s249, %s251, %s253, %s233
        $region36: #{tpu_custom_call.1} parent=31 // pred_fallthru
          _
        // Predicated region
        $region37: #{tpu_custom_call.1} parent=31 // pred_check
          %p256 = pneg %p80
        $region38: #{tpu_custom_call.1} parent=31 // pred_check_branch
          %258 = sbr.rel (%p256) target = $region40
        $region39: #{tpu_custom_call.1} parent=31 // pred_region
          %p259 = scmp.lt.s32.totalorder %s25, 1
          %s260 = scalar_select %p259, %s25, 1
          %p261 = scmp.lt.s32.totalorder %s26, 1
          %s262 = scalar_select %p261, %s26, 1
          %s263 = smul.addr %s260, 2
          %s264 = sadd.s32 %s262, %s263
          %s265 = smul.addr %s264, 4
          %s266 = scalar_lea.vmem %s1, %s265
        $region40: #{tpu_custom_call.1} parent=31 // pred_fallthru
          _
      $region32: #{tpu_custom_call.1} parent=5 // pred_fallthru
        _
      %p267 = scmp.le.s32.totalorder 1, %s18
      %p268 = scmp.lt.s32.totalorder %s18, 5
      %p269 = pnand %p267, %p268
      %p270 = pneg %p269
      // Predicated region
      $region41: #{tpu_custom_call.1} parent=5 // pred_check
        _
      $region42: #{tpu_custom_call.1} parent=5 // pred_check_branch
        %272 = sbr.rel (%p269) target = $region44
      $region43: #{tpu_custom_call.1} parent=5 // pred_region
        %s273 = ssub.s32 %s18, 1
        %s274 = sand.u32 %s45, 1
        %s275 = scalar_lea.sflag [#allocation4], %s274
        %s276 = sand.u32 %s45, 1
        %s277 = smul.addr %s276, 8
        %s278 = scalar_lea.vmem [#allocation3], %s277
        // Predicated region
        $region45: #{tpu_custom_call.1} parent=43 // pred_check
          %p279 = pneg %p58
        $region46: #{tpu_custom_call.1} parent=43 // pred_check_branch
          %281 = sbr.rel (%p279) target = $region48
        $region47: #{tpu_custom_call.1} parent=43 // pred_region
          %282 = dma.done %s275, 128
        $region48: #{tpu_custom_call.1} parent=43 // pred_fallthru
          _
        %s283 = sand.u32 %s45, 1
        %s284 = scalar_lea.sflag [#allocation4], %s283
        %s285 = sand.u32 %s45, 1
        %s286 = smul.addr %s285, 8
        %s287 = scalar_lea.vmem [#allocation3], %s286
        %p288 = pneg %p58
        %p289 = pneg %p55
        %p290 = scmp.lt.s32.totalorder %s27, 1
        %s291 = scalar_select %p290, %s27, 1
        %p292 = scmp.lt.s32.totalorder %s28, 1
        %s293 = scalar_select %p292, %s28, 1
        %s294 = smul.addr %s291, 2
        %s295 = sadd.s32 %s293, %s294
        %s296 = smul.addr %s295, 4
        %s297 = scalar_lea.vmem %s1, %s296
        %p298 = pneg %p86
        %p299 = pneg %p83
        %p300 = pneg %p107
        %p301 = pneg %p104
        %p302 = pneg %p128
        %p303 = pneg %p125
        %p304 = pneg %p149
        %p305 = pneg %p146
        %p306 = pneg %p170
        %p307 = pneg %p167
        %p308 = pneg %p198
        %p309 = pneg %p195
        %s310 = sand.u32 %s185, 1
        %s311 = scalar_lea.sflag [#allocation5], %s310
        %s312 = sand.u32 %s185, 1
        %s313 = smul.addr %s312, 16
        %s314 = scalar_lea.vmem [#allocation6], %s313
        %s315 = smul.u32 2, %s28
        %s316 = ssub.s32 5, %s315
        %p317 = scmp.lt.s32.totalorder %s316, 2
        %s318 = scalar_select %p317, %s316, 2
        %s319 = smul.u32 64, %s318
        %p320 = scmp.lt.s32.totalorder %s27, 1
        %s321 = scalar_select %p320, %s27, 1
        %p322 = scmp.lt.s32.totalorder %s28, 1
        %s323 = scalar_select %p322, %s28, 1
        %s324 = smul.addr %s321, 2
        %s325 = sadd.s32 %s323, %s324
        %s326 = smul.addr %s325, 4
        %s327 = scalar_lea.vmem %s1, %s326
        %s328 = smul.u32 2, %s28
        %v329 = vld [vmem:[%s278] sm:$0xff]
        %v331 = vcombine.high %v329, %v329
        %333 = vst [vmem:[#allocation2] sm:$0xf] %v329
        %334 = vst [vmem:[#allocation2 + $0x8] sm:$0xf] %v331
        %v335 = vld [vmem:[%s327] sm:$0xf]
        %vm336 = vcmask 519168
        %337 = vst.msk [vmem:[#allocation2 + $0x10] sm:$0xf] %vm336, %v335
        %v338 = vld [vmem:[%s278] sm:$0xff]
        %v340 = vcombine.low %v338, %v338
        %341 = vrot.lane.b32.xlu0 %v340, 127
        %v342 = vpop.permute.xlu0 %341
        %343 = vrot.lane.b32.xlu0 %v338, 127
        %v344 = vpop.permute.xlu0 %343
        %vm345 = vcmask 1039360
        %v346 = vsel %vm345, %v342, %v344
        %349 = vst [vmem:[#allocation2] sm:$0xf0] %v346
        %vm350 = vcmask 1039364
        %351 = vst.msk [vmem:[#allocation2 + $0x8] sm:$0xf0] %vm350, %v344
        %v352 = vld [vmem:[%s327] sm:$0xf]
        %v354 = vrot.slane %v352, 4
        %355 = vrot.lane.b32.xlu0 %v354, 127
        %v356 = vpop.permute.xlu0 %355
        %vm358 = vcmask 1048572
        %359 = vst.msk [vmem:[#allocation2 + $0x8] sm:$0xf0] %vm358, %v356
        %vm360 = vcmask 523268
        %361 = vst.msk [vmem:[#allocation2 + $0x10] sm:$0xf0] %vm360, %v356
        %v362 = vld [vmem:[%s278] sm:$0xff]
        %v364 = vcombine.high %v362, %v362
        %365 = vrot.lane.b32.xlu0 %v362, 126
        %v366 = vpop.permute.xlu0 %365
        %367 = vrot.lane.b32.xlu0 %v364, 126
        %v368 = vpop.permute.xlu0 %367
        %vm369 = vcmask 1031168
        %v370 = vsel %vm369, %v366, %v368
        %373 = vst [vmem:[#allocation2 + $0x18] sm:$0xf] %v370
        %vm374 = vcmask 1027072
        %375 = vst.msk [vmem:[#allocation2 + $0x20] sm:$0xf] %vm374, %v368
        %v376 = vld [vmem:[%s327] sm:$0xf]
        %378 = vrot.lane.b32.xlu0 %v376, 126
        %v379 = vpop.permute.xlu0 %378
        %vm381 = vcmask 1044464
        %382 = vst.msk [vmem:[#allocation2 + $0x20] sm:$0xf] %vm381, %v379
        %383 = vst.msk [vmem:[#allocation2 + $0x28] sm:$0xf] %vm336, %v379
        %v384 = vld [vmem:[%s2] sm:$0xf]
        %v385 = vld [vmem:[#allocation2] sm:$0xff]
        %v386 = vld [vmem:[#allocation2 + $0x8] sm:$0xff]
        %v387 = vld [vmem:[#allocation2 + $0x18] sm:$0xf]
        %v388 = vld [vmem:[#allocation2 + $0x20] sm:$0xf]
        %s389 = scalar_lea.vmem %s2, 4
        %v390 = vld [vmem:[%s389] sm:$0xf]
        %v391 = vld [vmem:[#allocation2 + $0x10] sm:$0xff]
        %v392 = vld [vmem:[#allocation2 + $0x28] sm:$0xf]
        %399 = vrot.lane.b32.xlu0 %v385, 96
        %v400 = vpop.permute.xlu0 %399
        %401 = vrot.lane.b32.xlu0 %v386, 96
        %v402 = vpop.permute.xlu0 %401
        %403 = vrot.lane.b32.xlu0 %v391, 96
        %v404 = vpop.permute.xlu0 %403
        %405 = vrot.lane.b32.xlu0 %v387, 96
        %v406 = vpop.permute.xlu0 %405
        %407 = vrot.lane.b32.xlu0 %v388, 96
        %v408 = vpop.permute.xlu0 %407
        %409 = vrot.lane.b32.xlu0 %v392, 96
        %v410 = vpop.permute.xlu0 %409
        %vm411 = vcmask 785408
        %v412 = vsel %vm411, %v400, %v402
        %v413 = vsel %vm411, %v402, %v404
        %v414 = vsel %vm411, %v406, %v408
        %v415 = vsel %vm411, %v408, %v410
        %vm418 = vcmask 97280
        %v420 = vsel %vm418, %v390, 0
        %vm422 = vcmask 1043456
        %v423 = vsel %vm422, %v414, 0
        %v425 = vsel %vm422, %v415, 0
        %427 = vmatprep.subr.mxu0 %v413
        %428 = vmatpush1.msra.mxu0 %v412
        %429 = vmatprep.subr.mxu0 %v425
        %430 = vmatpush1.msra.mxu0 %v423
        %431 = vmatprep.subr.mxu0 0.0
        %432 = vmatpush1.msra.mxu0 0.0
        %433 = vmatprep.subr.mxu0 0.0
        %434 = vmatpush1.msra.mxu0 0.0
        %435 = vmatprep.subr.mxu0 0.0
        %436 = vmatpush1.msra.mxu0 0.0
        %437 = vmatprep.subr.mxu0 0.0
        %438 = vmatpush1.msra.mxu0 0.0
        %439 = vmatprep.subr.mxu0 0.0
        %440 = vmatpush1.msra.mxu0 0.0
        %441 = vmatprep.subr.mxu0 0.0
        %442 = vmatpush1.msra.mxu0 0.0
        %443 = vmatprep.subr.mxu0 0.0
        %444 = vmatpush1.msra.mxu0 0.0
        %445 = vmatprep.subr.mxu0 0.0
        %446 = vmatpush1.msra.mxu0 0.0
        %447 = vmatprep.subr.mxu0 0.0
        %448 = vmatpush1.msra.mxu0 0.0
        %449 = vmatprep.subr.mxu0 0.0
        %450 = vmatpush1.msra.mxu0 0.0
        %451 = vmatprep.subr.mxu0 0.0
        %452 = vmatpush1.msra.mxu0 0.0
        %453 = vmatprep.subr.mxu0 0.0
        %454 = vmatpush1.msra.mxu0 0.0
        %455 = vmatprep.subr.mxu0 0.0
        %456 = vmatpush1.msra.mxu0 0.0
        %457 = vmatprep.subr.mxu0 0.0
        %458 = vmatpush1.msra.mxu0 0.0
        %459 = vmatprep.subr.mxu0 0.0
        %460 = vmatpush1.msra.mxu0 0.0
        %461 = vmatprep.subr.mxu0 0.0
        %462 = vmatpush1.msra.mxu0 0.0
        %463 = vmatprep.subr.mxu0 0.0
        %464 = vmatpush1.msra.mxu0 0.0
        %465 = vmatprep.subr.mxu0 0.0
        %466 = vmatpush1.msra.mxu0 0.0
        %467 = vmatprep.subr.mxu0 0.0
        %468 = vmatpush1.msra.mxu0 0.0
        %469 = vmatprep.subr.mxu0 0.0
        %470 = vmatpush1.msra.mxu0 0.0
        %471 = vmatprep.subr.mxu0 0.0
        %472 = vmatpush1.msra.mxu0 0.0
        %473 = vmatprep.subr.mxu0 0.0
        %474 = vmatpush1.msra.mxu0 0.0
        %475 = vmatprep.subr.mxu0 0.0
        %476 = vmatpush1.msra.mxu0 0.0
        %477 = vmatprep.subr.mxu0 0.0
        %478 = vmatpush1.msra.mxu0 0.0
        %479 = vmatprep.subr.mxu0 0.0
        %480 = vmatpush1.msra.mxu0 0.0
        %481 = vmatprep.subr.mxu0 0.0
        %482 = vmatpush1.msra.mxu0 0.0
        %483 = vmatprep.subr.mxu0 0.0
        %484 = vmatpush1.msra.mxu0 0.0
        %485 = vmatprep.subr.mxu0 0.0
        %486 = vmatpush1.msra.mxu0 0.0
        %487 = vmatprep.subr.mxu0 0.0
        %488 = vmatpush1.msra.mxu0 0.0
        %489 = vmatprep.subr.mxu0 0.0
        %490 = vmatpush1.msra.mxu0 0.0
        %491 = vmatprep.mubr.f32.mxu0 0.0
        %492 = vmatmul.mubr.f32.gmra.mrb[0].mxu0 %v420
        %v493 = vpop.f32.mrb[0].mxu0
        %v494 = vadd.f32 0.0, %v493
        %v495 = vpop.f32.mrb[0].mxu0
        %v496 = vadd.f32 0.0, %v495
        %497 = vdwg.mxu0
        %v499 = vsel %vm418, %v384, 0
        %v501 = vsel %vm422, %v387, 0
        %v503 = vsel %vm422, %v388, 0
        %505 = vmatprep.subr.mxu0 %v386
        %506 = vmatpush1.msra.mxu0 %v385
        %507 = vmatprep.subr.mxu0 %v503
        %508 = vmatpush1.msra.mxu0 %v501
        %509 = vmatprep.subr.mxu0 0.0
        %510 = vmatpush1.msra.mxu0 0.0
        %511 = vmatprep.subr.mxu0 0.0
        %512 = vmatpush1.msra.mxu0 0.0
        %513 = vmatprep.subr.mxu0 0.0
        %514 = vmatpush1.msra.mxu0 0.0
        %515 = vmatprep.subr.mxu0 0.0
        %516 = vmatpush1.msra.mxu0 0.0
        %517 = vmatprep.subr.mxu0 0.0
        %518 = vmatpush1.msra.mxu0 0.0
        %519 = vmatprep.subr.mxu0 0.0
        %520 = vmatpush1.msra.mxu0 0.0
        %521 = vmatprep.subr.mxu0 0.0
        %522 = vmatpush1.msra.mxu0 0.0
        %523 = vmatprep.subr.mxu0 0.0
        %524 = vmatpush1.msra.mxu0 0.0
        %525 = vmatprep.subr.mxu0 0.0
        %526 = vmatpush1.msra.mxu0 0.0
        %527 = vmatprep.subr.mxu0 0.0
        %528 = vmatpush1.msra.mxu0 0.0
        %529 = vmatprep.subr.mxu0 0.0
        %530 = vmatpush1.msra.mxu0 0.0
        %531 = vmatprep.subr.mxu0 0.0
        %532 = vmatpush1.msra.mxu0 0.0
        %533 = vmatprep.subr.mxu0 0.0
        %534 = vmatpush1.msra.mxu0 0.0
        %535 = vmatprep.subr.mxu0 0.0
        %536 = vmatpush1.msra.mxu0 0.0
        %537 = vmatprep.subr.mxu0 0.0
        %538 = vmatpush1.msra.mxu0 0.0
        %539 = vmatprep.subr.mxu0 0.0
        %540 = vmatpush1.msra.mxu0 0.0
        %541 = vmatprep.subr.mxu0 0.0
        %542 = vmatpush1.msra.mxu0 0.0
        %543 = vmatprep.subr.mxu0 0.0
        %544 = vmatpush1.msra.mxu0 0.0
        %545 = vmatprep.subr.mxu0 0.0
        %546 = vmatpush1.msra.mxu0 0.0
        %547 = vmatprep.subr.mxu0 0.0
        %548 = vmatpush1.msra.mxu0 0.0
        %549 = vmatprep.subr.mxu0 0.0
        %550 = vmatpush1.msra.mxu0 0.0
        %551 = vmatprep.subr.mxu0 0.0
        %552 = vmatpush1.msra.mxu0 0.0
        %553 = vmatprep.subr.mxu0 0.0
        %554 = vmatpush1.msra.mxu0 0.0
        %555 = vmatprep.subr.mxu0 0.0
        %556 = vmatpush1.msra.mxu0 0.0
        %557 = vmatprep.subr.mxu0 0.0
        %558 = vmatpush1.msra.mxu0 0.0
        %559 = vmatprep.subr.mxu0 0.0
        %560 = vmatpush1.msra.mxu0 0.0
        %561 = vmatprep.subr.mxu0 0.0
        %562 = vmatpush1.msra.mxu0 0.0
        %563 = vmatprep.subr.mxu0 0.0
        %564 = vmatpush1.msra.mxu0 0.0
        %565 = vmatprep.subr.mxu0 0.0
        %566 = vmatpush1.msra.mxu0 0.0
        %567 = vmatprep.subr.mxu0 0.0
        %568 = vmatpush1.msra.mxu0 0.0
        %569 = vmatprep.mubr.f32.mxu0 0.0
        %570 = vmatmul.mubr.f32.gmra.mrb[0].mxu0 %v499
        %v571 = vpop.f32.mrb[0].mxu0
        %v572 = vadd.f32 %v494, %v571
        %v573 = vpop.f32.mrb[0].mxu0
        %v574 = vadd.f32 %v496, %v573
        %575 = vdwg.mxu0
        %s576 = scalar_lea.vmem %s2, 8
        %v577 = vld [vmem:[%s576] sm:$0xf]
        %578 = vrot.lane.b32.xlu0 %v385, 64
        %v579 = vpop.permute.xlu0 %578
        %580 = vrot.lane.b32.xlu0 %v386, 64
        %v581 = vpop.permute.xlu0 %580
        %582 = vrot.lane.b32.xlu0 %v391, 64
        %v583 = vpop.permute.xlu0 %582
        %584 = vrot.lane.b32.xlu0 %v387, 64
        %v585 = vpop.permute.xlu0 %584
        %586 = vrot.lane.b32.xlu0 %v388, 64
        %v587 = vpop.permute.xlu0 %586
        %588 = vrot.lane.b32.xlu0 %v392, 64
        %v589 = vpop.permute.xlu0 %588
        %vm590 = vcmask 523264
        %v591 = vsel %vm590, %v579, %v581
        %v592 = vsel %vm590, %v581, %v583
        %v593 = vsel %vm590, %v585, %v587
        %v594 = vsel %vm590, %v587, %v589
        %v598 = vsel %vm418, %v577, 0
        %v600 = vsel %vm422, %v593, 0
        %v602 = vsel %vm422, %v594, 0
        %604 = vmatprep.subr.mxu0 %v592
        %605 = vmatpush1.msra.mxu0 %v591
        %606 = vmatprep.subr.mxu0 %v602
        %607 = vmatpush1.msra.mxu0 %v600
        %608 = vmatprep.subr.mxu0 0.0
        %609 = vmatpush1.msra.mxu0 0.0
        %610 = vmatprep.subr.mxu0 0.0
        %611 = vmatpush1.msra.mxu0 0.0
        %612 = vmatprep.subr.mxu0 0.0
        %613 = vmatpush1.msra.mxu0 0.0
        %614 = vmatprep.subr.mxu0 0.0
        %615 = vmatpush1.msra.mxu0 0.0
        %616 = vmatprep.subr.mxu0 0.0
        %617 = vmatpush1.msra.mxu0 0.0
        %618 = vmatprep.subr.mxu0 0.0
        %619 = vmatpush1.msra.mxu0 0.0
        %620 = vmatprep.subr.mxu0 0.0
        %621 = vmatpush1.msra.mxu0 0.0
        %622 = vmatprep.subr.mxu0 0.0
        %623 = vmatpush1.msra.mxu0 0.0
        %624 = vmatprep.subr.mxu0 0.0
        %625 = vmatpush1.msra.mxu0 0.0
        %626 = vmatprep.subr.mxu0 0.0
        %627 = vmatpush1.msra.mxu0 0.0
        %628 = vmatprep.subr.mxu0 0.0
        %629 = vmatpush1.msra.mxu0 0.0
        %630 = vmatprep.subr.mxu0 0.0
        %631 = vmatpush1.msra.mxu0 0.0
        %632 = vmatprep.subr.mxu0 0.0
        %633 = vmatpush1.msra.mxu0 0.0
        %634 = vmatprep.subr.mxu0 0.0
        %635 = vmatpush1.msra.mxu0 0.0
        %636 = vmatprep.subr.mxu0 0.0
        %637 = vmatpush1.msra.mxu0 0.0
        %638 = vmatprep.subr.mxu0 0.0
        %639 = vmatpush1.msra.mxu0 0.0
        %640 = vmatprep.subr.mxu0 0.0
        %641 = vmatpush1.msra.mxu0 0.0
        %642 = vmatprep.subr.mxu0 0.0
        %643 = vmatpush1.msra.mxu0 0.0
        %644 = vmatprep.subr.mxu0 0.0
        %645 = vmatpush1.msra.mxu0 0.0
        %646 = vmatprep.subr.mxu0 0.0
        %647 = vmatpush1.msra.mxu0 0.0
        %648 = vmatprep.subr.mxu0 0.0
        %649 = vmatpush1.msra.mxu0 0.0
        %650 = vmatprep.subr.mxu0 0.0
        %651 = vmatpush1.msra.mxu0 0.0
        %652 = vmatprep.subr.mxu0 0.0
        %653 = vmatpush1.msra.mxu0 0.0
        %654 = vmatprep.subr.mxu0 0.0
        %655 = vmatpush1.msra.mxu0 0.0
        %656 = vmatprep.subr.mxu0 0.0
        %657 = vmatpush1.msra.mxu0 0.0
        %658 = vmatprep.subr.mxu0 0.0
        %659 = vmatpush1.msra.mxu0 0.0
        %660 = vmatprep.subr.mxu0 0.0
        %661 = vmatpush1.msra.mxu0 0.0
        %662 = vmatprep.subr.mxu0 0.0
        %663 = vmatpush1.msra.mxu0 0.0
        %664 = vmatprep.subr.mxu0 0.0
        %665 = vmatpush1.msra.mxu0 0.0
        %666 = vmatprep.subr.mxu0 0.0
        %667 = vmatpush1.msra.mxu0 0.0
        %668 = vmatprep.mubr.f32.mxu0 0.0
        %669 = vmatmul.mubr.f32.gmra.mrb[0].mxu0 %v598
        %v670 = vpop.f32.mrb[0].mxu0
        %v671 = vadd.f32 0.0, %v670
        %v672 = vpop.f32.mrb[0].mxu0
        %v673 = vadd.f32 0.0, %v672
        %674 = vdwg.mxu0
        %v675 = vadd.f32 %v572, %v671
        %v676 = vadd.f32 %v574, %v673
        %v677 = vld [vmem:[%s3] sm:$0xf]
        %679 = vset.pattern.permute.xlu0 0
        %680 = vperm.xlu0 %679, %v677
        %v681 = vpop.permute.xlu0 %680
        %v683 = vadd.f32 %v675, %v681
        %v684 = vadd.f32 %v676, %v681
        %v685 = vmax.f32 %v683, 0.0
        %v686 = vmax.f32 %v684, 0.0
        %v687 = vld [vmem:[%s4] sm:$0xff]
        %v688 = vld [vmem:[%s5] sm:$0xff]
        %690 = vset.pattern.permute.xlu0 0
        %691 = vperm.xlu0 %690, %v688
        %v692 = vpop.permute.xlu0 %691
        %vm694 = vcmask 31744
        %v696 = vsel %vm694, %v687, 0
        %v699 = vsel %vm422, %v685, 0
        %v702 = vsel %vm422, %v686, 0
        %704 = vmatprep.subr.mxu0 %v702
        %705 = vmatpush1.msra.mxu0 %v699
        %706 = vmatprep.subr.mxu0 0.0
        %707 = vmatpush1.msra.mxu0 0.0
        %708 = vmatprep.subr.mxu0 0.0
        %709 = vmatpush1.msra.mxu0 0.0
        %710 = vmatprep.subr.mxu0 0.0
        %711 = vmatpush1.msra.mxu0 0.0
        %712 = vmatprep.subr.mxu0 0.0
        %713 = vmatpush1.msra.mxu0 0.0
        %714 = vmatprep.subr.mxu0 0.0
        %715 = vmatpush1.msra.mxu0 0.0
        %716 = vmatprep.subr.mxu0 0.0
        %717 = vmatpush1.msra.mxu0 0.0
        %718 = vmatprep.subr.mxu0 0.0
        %719 = vmatpush1.msra.mxu0 0.0
        %720 = vmatprep.subr.mxu0 0.0
        %721 = vmatpush1.msra.mxu0 0.0
        %722 = vmatprep.subr.mxu0 0.0
        %723 = vmatpush1.msra.mxu0 0.0
        %724 = vmatprep.subr.mxu0 0.0
        %725 = vmatpush1.msra.mxu0 0.0
        %726 = vmatprep.subr.mxu0 0.0
        %727 = vmatpush1.msra.mxu0 0.0
        %728 = vmatprep.subr.mxu0 0.0
        %729 = vmatpush1.msra.mxu0 0.0
        %730 = vmatprep.subr.mxu0 0.0
        %731 = vmatpush1.msra.mxu0 0.0
        %732 = vmatprep.subr.mxu0 0.0
        %733 = vmatpush1.msra.mxu0 0.0
        %734 = vmatprep.subr.mxu0 0.0
        %735 = vmatpush1.msra.mxu0 0.0
        %736 = vmatprep.subr.mxu0 0.0
        %737 = vmatpush1.msra.mxu0 0.0
        %738 = vmatprep.subr.mxu0 0.0
        %739 = vmatpush1.msra.mxu0 0.0
        %740 = vmatprep.subr.mxu0 0.0
        %741 = vmatpush1.msra.mxu0 0.0
        %742 = vmatprep.subr.mxu0 0.0
        %743 = vmatpush1.msra.mxu0 0.0
        %744 = vmatprep.subr.mxu0 0.0
        %745 = vmatpush1.msra.mxu0 0.0
        %746 = vmatprep.subr.mxu0 0.0
        %747 = vmatpush1.msra.mxu0 0.0
        %748 = vmatprep.subr.mxu0 0.0
        %749 = vmatpush1.msra.mxu0 0.0
        %750 = vmatprep.subr.mxu0 0.0
        %751 = vmatpush1.msra.mxu0 0.0
        %752 = vmatprep.subr.mxu0 0.0
        %753 = vmatpush1.msra.mxu0 0.0
        %754 = vmatprep.subr.mxu0 0.0
        %755 = vmatpush1.msra.mxu0 0.0
        %756 = vmatprep.subr.mxu0 0.0
        %757 = vmatpush1.msra.mxu0 0.0
        %758 = vmatprep.subr.mxu0 0.0
        %759 = vmatpush1.msra.mxu0 0.0
        %760 = vmatprep.subr.mxu0 0.0
        %761 = vmatpush1.msra.mxu0 0.0
        %762 = vmatprep.subr.mxu0 0.0
        %763 = vmatpush1.msra.mxu0 0.0
        %764 = vmatprep.subr.mxu0 0.0
        %765 = vmatpush1.msra.mxu0 0.0
        %766 = vmatprep.subr.mxu0 0.0
        %767 = vmatpush1.msra.mxu0 0.0
        %768 = vmatprep.mubr.f32.mxu0 0.0
        %769 = vmatmul.mubr.f32.gmra.mrb[0].mxu0 %v696
        %v770 = vpop.f32.mrb[0].mxu0
        %v771 = vadd.f32 %v692, %v770
        %v772 = vpop.f32.mrb[0].mxu0
        %v773 = vadd.f32 %v692, %v772
        %774 = vdwg.mxu0
        %775 = vst [vmem:[%s314] sm:$0xff] %v771
        %776 = vst [vmem:[%s314 + $0x8] sm:$0xff] %v773
        %s777 = sand.u32 %s185, 1
        %s778 = scalar_lea.sflag [#allocation5], %s777
        %s779 = sand.u32 %s185, 1
        %s780 = smul.addr %s779, 16
        %s781 = scalar_lea.vmem [#allocation6], %s780
        // Predicated region
        $region49: #{tpu_custom_call.1} parent=43 // pred_check
          %p782 = pneg %p195
        $region50: #{tpu_custom_call.1} parent=43 // pred_check_branch
          %784 = sbr.rel (%p782) target = $region52
        $region51: #{tpu_custom_call.1} parent=43 // pred_region
          %s785 = smul.u32 2, %s28
          %s787 = ssub.s32 256, 256
          %788 = vsyncadd %s778, %s787
          %s789 = smul.addr %s27, 4
          %s790 = sadd.s32 %s785, %s789
          %s791 = smul.addr %s790, 128
          %s792 = scalar_lea.hbm %s6, %s791
          %s794 = sshll.u32 %s781, 4
          %s795 = int_to_ptr.vmem [resolvable:$true] %s794
          %797 = dma.vmem_to_hbm [thread:$0]  %s795, 256, %s792, %s778
        $region52: #{tpu_custom_call.1} parent=43 // pred_fallthru
          _
      $region44: #{tpu_custom_call.1} parent=5 // pred_fallthru
        _
      %p798 = scmp.le.s32.totalorder 2, %s18
      // Predicated region
      $region53: #{tpu_custom_call.1} parent=5 // pred_check
        %p799 = pneg %p798
      $region54: #{tpu_custom_call.1} parent=5 // pred_check_branch
        %801 = sbr.rel (%p799) target = $region56
      $region55: #{tpu_custom_call.1} parent=5 // pred_region
        %s802 = ssub.s32 %s18, 2
        // Predicated region
        $region57: #{tpu_custom_call.1} parent=55 // pred_check
          %p803 = pneg %p201
        $region58: #{tpu_custom_call.1} parent=55 // pred_check_branch
          %805 = sbr.rel (%p803) target = $region60
        $region59: #{tpu_custom_call.1} parent=55 // pred_region
          %s806 = sand.u32 %s186, 1
          %s807 = scalar_lea.sflag [#allocation5], %s806
          %s808 = sand.u32 %s186, 1
          %s809 = smul.addr %s808, 16
          %s810 = scalar_lea.vmem [#allocation6], %s809
          %811 = dma.done %s807, 256
        $region60: #{tpu_custom_call.1} parent=55 // pred_fallthru
          _
      $region56: #{tpu_custom_call.1} parent=5 // pred_fallthru
        _
    $region6: #{tpu_custom_call.1} parent=1 // loop_footer
      %s22 = sadd.s32 1, %s18
    $region7: #{tpu_custom_call.1} parent=1 // loop_footer_branch
      %17 = sbr.rel target = $region3
    $region8: #{tpu_custom_call.1} parent=1 // loop_exit
      _
    %812 = vsyncpa [#allocation4], 1
    %s813 = scalar_lea.sflag [#allocation4], 1
    %814 = vsyncpa %s813, 1
    %815 = vsyncpa [#allocation5], 1
    %s816 = scalar_lea.sflag [#allocation5], 1
    %817 = vsyncpa %s816, 1

</llo_original>
